<compile_context>
chip_gen: v7x
topology: tpu7x:2x2x1
jax: 0.10.0
libtpu: 0.0.40
codegen_flags: <defaults>
</compile_context>

<pallas_src>
import functools

import jax
import jax.numpy as jnp
import numpy as np
from jax import lax
from jax.experimental import pallas as pl
from jax.experimental.pallas import tpu as pltpu


def _round_up(v, m):
    return ((v + m - 1) // m) * m


# --------------------------------------------------------------------------
# Kernel
# --------------------------------------------------------------------------
def qcnn_kernel(x_ref, w1b_ref, b1_ref, w2c_ref, b2_ref,
                wh1_ref, bh1_ref, g1_ref, be1_ref,
                wh2t_ref, bh2_ref, g2_ref, be2_ref,
                wh3t_ref, bh3_ref, out_ref, *, L, C1, C2):
    eps = 1e-5
    bf16, f32 = jnp.bfloat16, jnp.float32

    # Conv1 + ReLU: one dense matmul against the lane-padded banded weight.
    x = x_ref[...].astype(bf16)                                    # (TB, 128)
    h1 = jnp.maximum(
        jnp.dot(x, w1b_ref[...], preferred_element_type=f32) + b1_ref[...],
        0.0)                                                       # (TB, L*C1)
    h1b = h1.astype(bf16)

    # Conv2 + ReLU + flatten + head Linear #1, fused per frame position l:
    #   z1 = bh1 + sum_l relu(h1[:, l-1:l+2] @ W2taps + b2) @ Wh1[l]
    b2 = b2_ref[...]                                               # (1, C2) f32
    z1 = None
    for l in range(L):                                             # unrolled, L static
        lo, hi = max(l - 1, 0), min(l + 2, L)
        patch = h1b[:, lo * C1:hi * C1]                            # (TB, (hi-lo)*C1)
        taps = w2c_ref[(lo - l + 1) * C1:(hi - l + 1) * C1, :]     # ((hi-lo)*C1, C2)
        y = jnp.maximum(
            jnp.dot(patch, taps, preferred_element_type=f32) + b2, 0.0)
        t = jnp.dot(y.astype(bf16), wh1_ref[l * C2:(l + 1) * C2, :],
                    preferred_element_type=f32)                    # (TB, H1)
        z1 = t if z1 is None else z1 + t
    z1 = z1 + bh1_ref[...]

    def layer_norm(z, g, b):
        mu = jnp.mean(z, axis=-1, keepdims=True)
        var = jnp.mean((z - mu) ** 2, axis=-1, keepdims=True)
        return (z - mu) * lax.rsqrt(var + eps) * g + b

    a1 = jnp.maximum(layer_norm(z1, g1_ref[...], be1_ref[...]), 0.0)
    z2 = jnp.dot(a1.astype(bf16), wh2t_ref[...],
                 preferred_element_type=f32) + bh2_ref[...]        # (TB, H2)
    a2 = jnp.maximum(layer_norm(z2, g2_ref[...], be2_ref[...]), 0.0)
    out_ref[...] = (jnp.dot(a2.astype(bf16), wh3t_ref[...],
                            preferred_element_type=f32)
                    + bh3_ref[...])                                # (TB, A_pad)


# --------------------------------------------------------------------------
# One-time (per parameter set) host-side weight re-layout
# --------------------------------------------------------------------------
def conv1d_as_banded_matrix(w, L):
    """PyTorch Conv1d weight (Cout, Cin, K), odd K, 'same' padding -> the
    (L*Cin, L*Cout) block-banded matrix mapping l-major flat inputs to
    l-major flat outputs.  Built on the host with NumPy, once per param set."""
    w = np.asarray(w)
    Cout, Cin, K = w.shape
    pad = K // 2
    Wb = np.zeros((L * Cin, L * Cout), np.float32)
    for l_out in range(L):
        for t in range(K):
            l_in = l_out + t - pad
            if 0 <= l_in < L:
                Wb[l_in * Cin:(l_in + 1) * Cin,
                   l_out * Cout:(l_out + 1) * Cout] = w[:, :, t].T
    return Wb


def prepare_qcnn_params(params, num_frames):
    (w1, b1, w2, b2, wh1, bh1, g1, be1, wh2, bh2, g2, be2, wh3, bh3) = params
    L = num_frames
    C1, Cin, K = w1.shape
    C2 = w2.shape[0]
    H1, H2, A = wh1.shape[0], wh2.shape[0], wh3.shape[0]
    assert K == 3 and w2.shape[2] == 3, "module uses padding=1 => kernel_size=3"

    kin = L * Cin
    kin_pad = _round_up(kin, 128)       # lane-dense input tile
    a_pad = _round_up(A, 128)           # lane-dense output tile

    # Conv1 as a banded matrix, rows zero-padded to the lane-padded input.
    w1b = np.zeros((kin_pad, L * C1), np.float32)
    w1b[:kin, :] = conv1d_as_banded_matrix(w1, L)
    b1r = np.tile(np.asarray(b1), L).reshape(1, L * C1)

    # Conv2 as a compact per-tap matrix: rows t*C1+ci map input position l-1+t.
    w2np = np.asarray(w2)                                        # (C2, C1, 3)
    w2c = np.concatenate([w2np[:, :, t].T for t in range(3)], axis=0)  # (3*C1, C2)
    b2r = np.asarray(b2).reshape(1, C2)

    # PyTorch flatten index is c*L + l; reorder rows to l-major (l*C2 + c).
    wh1r = np.asarray(wh1).reshape(H1, C2, L).transpose(2, 1, 0).reshape(L * C2, H1)
    wh2t = np.asarray(wh2).T                                     # (H1, H2)
    wh3t = np.zeros((H2, a_pad), np.float32)
    wh3t[:, :A] = np.asarray(wh3).T
    bh3p = np.zeros((1, a_pad), np.float32)
    bh3p[0, :A] = np.asarray(bh3)

    r1 = lambda v: jnp.asarray(v).reshape(1, -1).astype(jnp.float32)
    bf = lambda v: jnp.asarray(v, dtype=jnp.bfloat16)

    consts = (bf(w1b), jnp.asarray(b1r, jnp.float32),
              bf(w2c), jnp.asarray(b2r, jnp.float32),
              bf(wh1r), r1(bh1), r1(g1), r1(be1),
              bf(wh2t), r1(bh2), r1(g2), r1(be2),
              bf(wh3t), jnp.asarray(bh3p, jnp.float32))
    dims = dict(L=L, Cin=Cin, C1=C1, C2=C2, H1=H1, H2=H2, A=A,
                kin_pad=kin_pad, a_pad=a_pad)
    return consts, dims


# --------------------------------------------------------------------------
# Forward wrapper
# --------------------------------------------------------------------------
def qcnn_forward(x, consts, dims, block_b=512):
    B = x.shape[0]
    L, Cin = dims["L"], dims["Cin"]
    kin_pad, a_pad, A = dims["kin_pad"], dims["a_pad"], dims["A"]

    x2d = x.reshape(B, L * Cin).astype(jnp.float32)
    x2d = jnp.pad(x2d, ((0, 0), (0, kin_pad - L * Cin)))     # lane-dense input

    # Batch tiling: tb multiple of 8; >= 2 grid steps when B is large enough
    # so the "parallel" axis can split across v7x's two TensorCores; tb sized
    # to divide B evenly-ish (small padded-row fraction).
    nb_target = max(1, pl.cdiv(B, block_b))
    if B >= 16:
        nb_target = max(nb_target, 2)
    tb = _round_up(pl.cdiv(B, nb_target), 8)
    nb = pl.cdiv(B, tb)
    bp = nb * tb
    if bp != B:
        x2d = jnp.pad(x2d, ((0, bp - B), (0, 0)))

    const_spec = lambda a: pl.BlockSpec(a.shape, lambda i: (0, 0))
    in_specs = ([pl.BlockSpec((tb, kin_pad), lambda i: (i, 0))]
                + [const_spec(a) for a in consts])

    kernel = functools.partial(qcnn_kernel, L=L, C1=dims["C1"], C2=dims["C2"])
    out = pl.pallas_call(
        kernel,
        out_shape=jax.ShapeDtypeStruct((bp, a_pad), jnp.float32),
        grid=(nb,),
        in_specs=in_specs,
        out_specs=pl.BlockSpec((tb, a_pad), lambda i: (i, 0)),
        compiler_params=pltpu.CompilerParams(
            dimension_semantics=("parallel",),
            vmem_limit_bytes=32 * 1024 * 1024),
    )(x2d, *consts)
    return out[:B, :A]


# --------------------------------------------------------------------------
# Deterministic init + pure-JAX reference (mirrors the PyTorch module)
# --------------------------------------------------------------------------
def init_params(key, state_dim, action_dim, num_frames, k=3):
    def u(kk, shape, fan_in):
        bound = 1.0 / float(fan_in) ** 0.5
        return jax.random.uniform(kk, shape, jnp.float32, -bound, bound)

    ks = jax.random.split(key, 10)
    w1 = u(ks[0], (64, state_dim, k), state_dim * k)
    b1 = u(ks[1], (64,), state_dim * k)
    w2 = u(ks[2], (128, 64, k), 64 * k)
    b2 = u(ks[3], (128,), 64 * k)
    wh1 = u(ks[4], (128, 128 * num_frames), 128 * num_frames)
    bh1 = u(ks[5], (128,), 128 * num_frames)
    g1 = jnp.ones((128,), jnp.float32)
    be1 = jnp.zeros((128,), jnp.float32)
    wh2 = u(ks[6], (64, 128), 128)
    bh2 = u(ks[7], (64,), 128)
    g2 = jnp.ones((64,), jnp.float32)
    be2 = jnp.zeros((64,), jnp.float32)
    wh3 = u(ks[8], (action_dim, 64), 64)
    bh3 = u(ks[9], (action_dim,), 64)
    return (w1, b1, w2, b2, wh1, bh1, g1, be1, wh2, bh2, g2, be2, wh3, bh3)


def ref_forward(x, params):
    (w1, b1, w2, b2, wh1, bh1, g1, be1, wh2, bh2, g2, be2, wh3, bh3) = params
    xn = jnp.transpose(x, (0, 2, 1))                        # (B, Cin, L)
    y1 = lax.conv_general_dilated(xn, w1, (1,), [(1, 1)],
                                  dimension_numbers=('NCH', 'OIH', 'NCH'))
    y1 = jax.nn.relu(y1 + b1[None, :, None])
    y2 = lax.conv_general_dilated(y1, w2, (1,), [(1, 1)],
                                  dimension_numbers=('NCH', 'OIH', 'NCH'))
    y2 = jax.nn.relu(y2 + b2[None, :, None])
    flat = y2.reshape(y2.shape[0], -1)                      # (B, 128*L), c-major

    def ln(z, g, b):
        mu = z.mean(-1, keepdims=True)
        var = ((z - mu) ** 2).mean(-1, keepdims=True)
        return (z - mu) / jnp.sqrt(var + 1e-5) * g + b

    h = jax.nn.relu(ln(flat @ wh1.T + bh1, g1, be1))
    h = jax.nn.relu(ln(h @ wh2.T + bh2, g2, be2))
    return h @ wh3.T + bh3


if __name__ == "__main__":
    B, state_dim, num_frames, action_dim = 2, 4, 8, 4
    key = jax.random.PRNGKey(0)
    kx, kp = jax.random.split(key)
    x = jax.random.normal(kx, (B, num_frames, state_dim), jnp.float32)
    params = init_params(kp, state_dim, action_dim, num_frames)

    consts, dims = prepare_qcnn_params(params, num_frames)   # once per param set
    out = qcnn_forward(x, consts, dims)
    out = jax.block_until_ready(out)

    ref = ref_forward(x, params)
    assert out.shape == (B, action_dim)
    # bf16 MXU operands with f32 accumulation -> loosened tolerance.
    assert jnp.allclose(out, ref, atol=2e-2, rtol=2e-2), (out, ref)
    print("KERNEL_OK")
</pallas_src>

<mosaic_0001>
module attributes {stable_mosaic.version = 11 : i64} {
  func.func @qcnn_kernel(%arg0: i32, %arg1: memref<8x128xf32, #tpu.memory_space<vmem>>, %arg2: memref<128x512xbf16, #tpu.memory_space<vmem>>, %arg3: memref<1x512xf32, #tpu.memory_space<vmem>>, %arg4: memref<192x128xbf16, #tpu.memory_space<vmem>>, %arg5: memref<1x128xf32, #tpu.memory_space<vmem>>, %arg6: memref<1024x128xbf16, #tpu.memory_space<vmem>>, %arg7: memref<1x128xf32, #tpu.memory_space<vmem>>, %arg8: memref<1x128xf32, #tpu.memory_space<vmem>>, %arg9: memref<1x128xf32, #tpu.memory_space<vmem>>, %arg10: memref<128x64xbf16, #tpu.memory_space<vmem>>, %arg11: memref<1x64xf32, #tpu.memory_space<vmem>>, %arg12: memref<1x64xf32, #tpu.memory_space<vmem>>, %arg13: memref<1x64xf32, #tpu.memory_space<vmem>>, %arg14: memref<64x128xbf16, #tpu.memory_space<vmem>>, %arg15: memref<1x128xf32, #tpu.memory_space<vmem>>, %arg16: memref<8x128xf32, #tpu.memory_space<vmem>>) attributes {dimension_semantics = [#tpu.dimension_semantics<parallel>], iteration_bounds = array<i64: 1>, scalar_prefetch = 0 : i64, scratch_operands = 0 : i64, tpu.core_type = #tpu.core_type<tc>, window_params = [{transform_indices = @transform_0, window_bounds = array<i64: 8, 128>}, {pipeline_mode = #tpu.pipeline_mode<synchronous>, transform_indices = @transform_1, window_bounds = array<i64: 128, 512>}, {pipeline_mode = #tpu.pipeline_mode<synchronous>, transform_indices = @transform_2, window_bounds = array<i64: 1, 512>}, {pipeline_mode = #tpu.pipeline_mode<synchronous>, transform_indices = @transform_3, window_bounds = array<i64: 192, 128>}, {pipeline_mode = #tpu.pipeline_mode<synchronous>, transform_indices = @transform_4, window_bounds = array<i64: 1, 128>}, {pipeline_mode = #tpu.pipeline_mode<synchronous>, transform_indices = @transform_5, window_bounds = array<i64: 1024, 128>}, {pipeline_mode = #tpu.pipeline_mode<synchronous>, transform_indices = @transform_6, window_bounds = array<i64: 1, 128>}, {pipeline_mode = #tpu.pipeline_mode<synchronous>, transform_indices = @transform_7, window_bounds = array<i64: 1, 128>}, {pipeline_mode = #tpu.pipeline_mode<synchronous>, transform_indices = @transform_8, window_bounds = array<i64: 1, 128>}, {pipeline_mode = #tpu.pipeline_mode<synchronous>, transform_indices = @transform_9, window_bounds = array<i64: 128, 64>}, {pipeline_mode = #tpu.pipeline_mode<synchronous>, transform_indices = @transform_10, window_bounds = array<i64: 1, 64>}, {pipeline_mode = #tpu.pipeline_mode<synchronous>, transform_indices = @transform_11, window_bounds = array<i64: 1, 64>}, {pipeline_mode = #tpu.pipeline_mode<synchronous>, transform_indices = @transform_12, window_bounds = array<i64: 1, 64>}, {pipeline_mode = #tpu.pipeline_mode<synchronous>, transform_indices = @transform_13, window_bounds = array<i64: 64, 128>}, {pipeline_mode = #tpu.pipeline_mode<synchronous>, transform_indices = @transform_14, window_bounds = array<i64: 1, 128>}, {transform_indices = @transform_15, window_bounds = array<i64: 8, 128>}]} {
    %c0 = arith.constant 0 : index
    %c0_0 = arith.constant 0 : index
    %0 = vector.load %arg1[%c0, %c0_0] : memref<8x128xf32, #tpu.memory_space<vmem>>, vector<8x128xf32>
    %1 = arith.truncf %0 : vector<8x128xf32> to vector<8x128xbf16>
    %c0_1 = arith.constant 0 : index
    %c0_2 = arith.constant 0 : index
    %2 = vector.load %arg2[%c0_1, %c0_2] : memref<128x512xbf16, #tpu.memory_space<vmem>>, vector<128x512xbf16>
    %cst = arith.constant dense<0.000000e+00> : vector<8x512xf32>
    %3 = tpu.matmul %1, %2, %cst {dimension_numbers = #tpu.dot_dimension_numbers<[1], [0], [0], [1], [0, 0, 1, 1], [], []>} : vector<8x128xbf16>, vector<128x512xbf16>, vector<8x512xf32> -> vector<8x512xf32>
    %c0_3 = arith.constant 0 : index
    %c0_4 = arith.constant 0 : index
    %4 = vector.load %arg3[%c0_3, %c0_4] : memref<1x512xf32, #tpu.memory_space<vmem>>, vector<1x512xf32>
    %5 = vector.broadcast %4 : vector<1x512xf32> to vector<8x512xf32>
    %6 = arith.addf %3, %5 : vector<8x512xf32>
    %cst_5 = arith.constant 0.000000e+00 : f32
    %7 = vector.broadcast %cst_5 : f32 to vector<8x512xf32>
    %8 = arith.maximumf %6, %7 : vector<8x512xf32>
    %9 = arith.truncf %8 : vector<8x512xf32> to vector<8x512xbf16>
    %c0_6 = arith.constant 0 : index
    %c0_7 = arith.constant 0 : index
    %10 = vector.load %arg5[%c0_6, %c0_7] : memref<1x128xf32, #tpu.memory_space<vmem>>, vector<1x128xf32>
    %11 = vector.extract_strided_slice %9 {offsets = [0, 0], sizes = [8, 128], strides = [1, 1]} : vector<8x512xbf16> to vector<8x128xbf16>
    %c64 = arith.constant 64 : index
    %c0_8 = arith.constant 0 : index
    %12 = vector.load %arg4[%c64, %c0_8] : memref<192x128xbf16, #tpu.memory_space<vmem>>, vector<128x128xbf16>
    %cst_9 = arith.constant dense<0.000000e+00> : vector<8x128xf32>
    %13 = tpu.matmul %11, %12, %cst_9 {dimension_numbers = #tpu.dot_dimension_numbers<[1], [0], [0], [1], [0, 0, 1, 1], [], []>} : vector<8x128xbf16>, vector<128x128xbf16>, vector<8x128xf32> -> vector<8x128xf32>
    %14 = vector.broadcast %10 : vector<1x128xf32> to vector<8x128xf32>
    %15 = arith.addf %13, %14 : vector<8x128xf32>
    %cst_10 = arith.constant 0.000000e+00 : f32
    %16 = vector.broadcast %cst_10 : f32 to vector<8x128xf32>
    %17 = arith.maximumf %15, %16 : vector<8x128xf32>
    %18 = arith.truncf %17 : vector<8x128xf32> to vector<8x128xbf16>
    %c0_11 = arith.constant 0 : index
    %c0_12 = arith.constant 0 : index
    %19 = vector.load %arg6[%c0_11, %c0_12] : memref<1024x128xbf16, #tpu.memory_space<vmem>>, vector<128x128xbf16>
    %cst_13 = arith.constant dense<0.000000e+00> : vector<8x128xf32>
    %20 = tpu.matmul %18, %19, %cst_13 {dimension_numbers = #tpu.dot_dimension_numbers<[1], [0], [0], [1], [0, 0, 1, 1], [], []>} : vector<8x128xbf16>, vector<128x128xbf16>, vector<8x128xf32> -> vector<8x128xf32>
    %21 = vector.extract_strided_slice %9 {offsets = [0, 0], sizes = [8, 192], strides = [1, 1]} : vector<8x512xbf16> to vector<8x192xbf16>
    %c0_14 = arith.constant 0 : index
    %c0_15 = arith.constant 0 : index
    %22 = vector.load %arg4[%c0_14, %c0_15] : memref<192x128xbf16, #tpu.memory_space<vmem>>, vector<192x128xbf16>
    %cst_16 = arith.constant dense<0.000000e+00> : vector<8x128xf32>
    %23 = tpu.matmul %21, %22, %cst_16 {dimension_numbers = #tpu.dot_dimension_numbers<[1], [0], [0], [1], [0, 0, 1, 1], [], []>} : vector<8x192xbf16>, vector<192x128xbf16>, vector<8x128xf32> -> vector<8x128xf32>
    %24 = vector.broadcast %10 : vector<1x128xf32> to vector<8x128xf32>
    %25 = arith.addf %23, %24 : vector<8x128xf32>
    %cst_17 = arith.constant 0.000000e+00 : f32
    %26 = vector.broadcast %cst_17 : f32 to vector<8x128xf32>
    %27 = arith.maximumf %25, %26 : vector<8x128xf32>
    %28 = arith.truncf %27 : vector<8x128xf32> to vector<8x128xbf16>
    %c128 = arith.constant 128 : index
    %c0_18 = arith.constant 0 : index
    %29 = vector.load %arg6[%c128, %c0_18] : memref<1024x128xbf16, #tpu.memory_space<vmem>>, vector<128x128xbf16>
    %cst_19 = arith.constant dense<0.000000e+00> : vector<8x128xf32>
    %30 = tpu.matmul %28, %29, %cst_19 {dimension_numbers = #tpu.dot_dimension_numbers<[1], [0], [0], [1], [0, 0, 1, 1], [], []>} : vector<8x128xbf16>, vector<128x128xbf16>, vector<8x128xf32> -> vector<8x128xf32>
    %31 = arith.addf %20, %30 : vector<8x128xf32>
    %32 = vector.extract_strided_slice %9 {offsets = [0, 64], sizes = [8, 192], strides = [1, 1]} : vector<8x512xbf16> to vector<8x192xbf16>
    %c0_20 = arith.constant 0 : index
    %c0_21 = arith.constant 0 : index
    %33 = vector.load %arg4[%c0_20, %c0_21] : memref<192x128xbf16, #tpu.memory_space<vmem>>, vector<192x128xbf16>
    %cst_22 = arith.constant dense<0.000000e+00> : vector<8x128xf32>
    %34 = tpu.matmul %32, %33, %cst_22 {dimension_numbers = #tpu.dot_dimension_numbers<[1], [0], [0], [1], [0, 0, 1, 1], [], []>} : vector<8x192xbf16>, vector<192x128xbf16>, vector<8x128xf32> -> vector<8x128xf32>
    %35 = vector.broadcast %10 : vector<1x128xf32> to vector<8x128xf32>
    %36 = arith.addf %34, %35 : vector<8x128xf32>
    %cst_23 = arith.constant 0.000000e+00 : f32
    %37 = vector.broadcast %cst_23 : f32 to vector<8x128xf32>
    %38 = arith.maximumf %36, %37 : vector<8x128xf32>
    %39 = arith.truncf %38 : vector<8x128xf32> to vector<8x128xbf16>
    %c256 = arith.constant 256 : index
    %c0_24 = arith.constant 0 : index
    %40 = vector.load %arg6[%c256, %c0_24] : memref<1024x128xbf16, #tpu.memory_space<vmem>>, vector<128x128xbf16>
    %cst_25 = arith.constant dense<0.000000e+00> : vector<8x128xf32>
    %41 = tpu.matmul %39, %40, %cst_25 {dimension_numbers = #tpu.dot_dimension_numbers<[1], [0], [0], [1], [0, 0, 1, 1], [], []>} : vector<8x128xbf16>, vector<128x128xbf16>, vector<8x128xf32> -> vector<8x128xf32>
    %42 = arith.addf %31, %41 : vector<8x128xf32>
    %43 = vector.extract_strided_slice %9 {offsets = [0, 128], sizes = [8, 192], strides = [1, 1]} : vector<8x512xbf16> to vector<8x192xbf16>
    %c0_26 = arith.constant 0 : index
    %c0_27 = arith.constant 0 : index
    %44 = vector.load %arg4[%c0_26, %c0_27] : memref<192x128xbf16, #tpu.memory_space<vmem>>, vector<192x128xbf16>
    %cst_28 = arith.constant dense<0.000000e+00> : vector<8x128xf32>
    %45 = tpu.matmul %43, %44, %cst_28 {dimension_numbers = #tpu.dot_dimension_numbers<[1], [0], [0], [1], [0, 0, 1, 1], [], []>} : vector<8x192xbf16>, vector<192x128xbf16>, vector<8x128xf32> -> vector<8x128xf32>
    %46 = vector.broadcast %10 : vector<1x128xf32> to vector<8x128xf32>
    %47 = arith.addf %45, %46 : vector<8x128xf32>
    %cst_29 = arith.constant 0.000000e+00 : f32
    %48 = vector.broadcast %cst_29 : f32 to vector<8x128xf32>
    %49 = arith.maximumf %47, %48 : vector<8x128xf32>
    %50 = arith.truncf %49 : vector<8x128xf32> to vector<8x128xbf16>
    %c384 = arith.constant 384 : index
    %c0_30 = arith.constant 0 : index
    %51 = vector.load %arg6[%c384, %c0_30] : memref<1024x128xbf16, #tpu.memory_space<vmem>>, vector<128x128xbf16>
    %cst_31 = arith.constant dense<0.000000e+00> : vector<8x128xf32>
    %52 = tpu.matmul %50, %51, %cst_31 {dimension_numbers = #tpu.dot_dimension_numbers<[1], [0], [0], [1], [0, 0, 1, 1], [], []>} : vector<8x128xbf16>, vector<128x128xbf16>, vector<8x128xf32> -> vector<8x128xf32>
    %53 = arith.addf %42, %52 : vector<8x128xf32>
    %54 = vector.extract_strided_slice %9 {offsets = [0, 192], sizes = [8, 192], strides = [1, 1]} : vector<8x512xbf16> to vector<8x192xbf16>
    %c0_32 = arith.constant 0 : index
    %c0_33 = arith.constant 0 : index
    %55 = vector.load %arg4[%c0_32, %c0_33] : memref<192x128xbf16, #tpu.memory_space<vmem>>, vector<192x128xbf16>
    %cst_34 = arith.constant dense<0.000000e+00> : vector<8x128xf32>
    %56 = tpu.matmul %54, %55, %cst_34 {dimension_numbers = #tpu.dot_dimension_numbers<[1], [0], [0], [1], [0, 0, 1, 1], [], []>} : vector<8x192xbf16>, vector<192x128xbf16>, vector<8x128xf32> -> vector<8x128xf32>
    %57 = vector.broadcast %10 : vector<1x128xf32> to vector<8x128xf32>
    %58 = arith.addf %56, %57 : vector<8x128xf32>
    %cst_35 = arith.constant 0.000000e+00 : f32
    %59 = vector.broadcast %cst_35 : f32 to vector<8x128xf32>
    %60 = arith.maximumf %58, %59 : vector<8x128xf32>
    %61 = arith.truncf %60 : vector<8x128xf32> to vector<8x128xbf16>
    %c512 = arith.constant 512 : index
    %c0_36 = arith.constant 0 : index
    %62 = vector.load %arg6[%c512, %c0_36] : memref<1024x128xbf16, #tpu.memory_space<vmem>>, vector<128x128xbf16>
    %cst_37 = arith.constant dense<0.000000e+00> : vector<8x128xf32>
    %63 = tpu.matmul %61, %62, %cst_37 {dimension_numbers = #tpu.dot_dimension_numbers<[1], [0], [0], [1], [0, 0, 1, 1], [], []>} : vector<8x128xbf16>, vector<128x128xbf16>, vector<8x128xf32> -> vector<8x128xf32>
    %64 = arith.addf %53, %63 : vector<8x128xf32>
    %65 = vector.extract_strided_slice %9 {offsets = [0, 256], sizes = [8, 192], strides = [1, 1]} : vector<8x512xbf16> to vector<8x192xbf16>
    %c0_38 = arith.constant 0 : index
    %c0_39 = arith.constant 0 : index
    %66 = vector.load %arg4[%c0_38, %c0_39] : memref<192x128xbf16, #tpu.memory_space<vmem>>, vector<192x128xbf16>
    %cst_40 = arith.constant dense<0.000000e+00> : vector<8x128xf32>
    %67 = tpu.matmul %65, %66, %cst_40 {dimension_numbers = #tpu.dot_dimension_numbers<[1], [0], [0], [1], [0, 0, 1, 1], [], []>} : vector<8x192xbf16>, vector<192x128xbf16>, vector<8x128xf32> -> vector<8x128xf32>
    %68 = vector.broadcast %10 : vector<1x128xf32> to vector<8x128xf32>
    %69 = arith.addf %67, %68 : vector<8x128xf32>
    %cst_41 = arith.constant 0.000000e+00 : f32
    %70 = vector.broadcast %cst_41 : f32 to vector<8x128xf32>
    %71 = arith.maximumf %69, %70 : vector<8x128xf32>
    %72 = arith.truncf %71 : vector<8x128xf32> to vector<8x128xbf16>
    %c640 = arith.constant 640 : index
    %c0_42 = arith.constant 0 : index
    %73 = vector.load %arg6[%c640, %c0_42] : memref<1024x128xbf16, #tpu.memory_space<vmem>>, vector<128x128xbf16>
    %cst_43 = arith.constant dense<0.000000e+00> : vector<8x128xf32>
    %74 = tpu.matmul %72, %73, %cst_43 {dimension_numbers = #tpu.dot_dimension_numbers<[1], [0], [0], [1], [0, 0, 1, 1], [], []>} : vector<8x128xbf16>, vector<128x128xbf16>, vector<8x128xf32> -> vector<8x128xf32>
    %75 = arith.addf %64, %74 : vector<8x128xf32>
    %76 = vector.extract_strided_slice %9 {offsets = [0, 320], sizes = [8, 192], strides = [1, 1]} : vector<8x512xbf16> to vector<8x192xbf16>
    %c0_44 = arith.constant 0 : index
    %c0_45 = arith.constant 0 : index
    %77 = vector.load %arg4[%c0_44, %c0_45] : memref<192x128xbf16, #tpu.memory_space<vmem>>, vector<192x128xbf16>
    %cst_46 = arith.constant dense<0.000000e+00> : vector<8x128xf32>
    %78 = tpu.matmul %76, %77, %cst_46 {dimension_numbers = #tpu.dot_dimension_numbers<[1], [0], [0], [1], [0, 0, 1, 1], [], []>} : vector<8x192xbf16>, vector<192x128xbf16>, vector<8x128xf32> -> vector<8x128xf32>
    %79 = vector.broadcast %10 : vector<1x128xf32> to vector<8x128xf32>
    %80 = arith.addf %78, %79 : vector<8x128xf32>
    %cst_47 = arith.constant 0.000000e+00 : f32
    %81 = vector.broadcast %cst_47 : f32 to vector<8x128xf32>
    %82 = arith.maximumf %80, %81 : vector<8x128xf32>
    %83 = arith.truncf %82 : vector<8x128xf32> to vector<8x128xbf16>
    %c768 = arith.constant 768 : index
    %c0_48 = arith.constant 0 : index
    %84 = vector.load %arg6[%c768, %c0_48] : memref<1024x128xbf16, #tpu.memory_space<vmem>>, vector<128x128xbf16>
    %cst_49 = arith.constant dense<0.000000e+00> : vector<8x128xf32>
    %85 = tpu.matmul %83, %84, %cst_49 {dimension_numbers = #tpu.dot_dimension_numbers<[1], [0], [0], [1], [0, 0, 1, 1], [], []>} : vector<8x128xbf16>, vector<128x128xbf16>, vector<8x128xf32> -> vector<8x128xf32>
    %86 = arith.addf %75, %85 : vector<8x128xf32>
    %87 = vector.extract_strided_slice %9 {offsets = [0, 384], sizes = [8, 128], strides = [1, 1]} : vector<8x512xbf16> to vector<8x128xbf16>
    %c0_50 = arith.constant 0 : index
    %c0_51 = arith.constant 0 : index
    %88 = vector.load %arg4[%c0_50, %c0_51] : memref<192x128xbf16, #tpu.memory_space<vmem>>, vector<128x128xbf16>
    %cst_52 = arith.constant dense<0.000000e+00> : vector<8x128xf32>
    %89 = tpu.matmul %87, %88, %cst_52 {dimension_numbers = #tpu.dot_dimension_numbers<[1], [0], [0], [1], [0, 0, 1, 1], [], []>} : vector<8x128xbf16>, vector<128x128xbf16>, vector<8x128xf32> -> vector<8x128xf32>
    %90 = vector.broadcast %10 : vector<1x128xf32> to vector<8x128xf32>
    %91 = arith.addf %89, %90 : vector<8x128xf32>
    %cst_53 = arith.constant 0.000000e+00 : f32
    %92 = vector.broadcast %cst_53 : f32 to vector<8x128xf32>
    %93 = arith.maximumf %91, %92 : vector<8x128xf32>
    %94 = arith.truncf %93 : vector<8x128xf32> to vector<8x128xbf16>
    %c896 = arith.constant 896 : index
    %c0_54 = arith.constant 0 : index
    %95 = vector.load %arg6[%c896, %c0_54] : memref<1024x128xbf16, #tpu.memory_space<vmem>>, vector<128x128xbf16>
    %cst_55 = arith.constant dense<0.000000e+00> : vector<8x128xf32>
    %96 = tpu.matmul %94, %95, %cst_55 {dimension_numbers = #tpu.dot_dimension_numbers<[1], [0], [0], [1], [0, 0, 1, 1], [], []>} : vector<8x128xbf16>, vector<128x128xbf16>, vector<8x128xf32> -> vector<8x128xf32>
    %97 = arith.addf %86, %96 : vector<8x128xf32>
    %c0_56 = arith.constant 0 : index
    %c0_57 = arith.constant 0 : index
    %98 = vector.load %arg7[%c0_56, %c0_57] : memref<1x128xf32, #tpu.memory_space<vmem>>, vector<1x128xf32>
    %99 = vector.broadcast %98 : vector<1x128xf32> to vector<8x128xf32>
    %100 = arith.addf %97, %99 : vector<8x128xf32>
    %c0_58 = arith.constant 0 : index
    %c0_59 = arith.constant 0 : index
    %101 = vector.load %arg8[%c0_58, %c0_59] : memref<1x128xf32, #tpu.memory_space<vmem>>, vector<1x128xf32>
    %c0_60 = arith.constant 0 : index
    %c0_61 = arith.constant 0 : index
    %102 = vector.load %arg9[%c0_60, %c0_61] : memref<1x128xf32, #tpu.memory_space<vmem>>, vector<1x128xf32>
    %cst_62 = arith.constant dense<0.000000e+00> : vector<8xf32>
    %103 = vector.multi_reduction <add>, %100, %cst_62 [1] : vector<8x128xf32> to vector<8xf32>
    %104 = vector.shape_cast %103 : vector<8xf32> to vector<8x1xf32>
    %cst_63 = arith.constant 1.280000e+02 : f32
    %105 = vector.broadcast %cst_63 : f32 to vector<8x1xf32>
    %106 = arith.divf %104, %105 : vector<8x1xf32>
    %107 = vector.broadcast %106 : vector<8x1xf32> to vector<8x128xf32>
    %108 = arith.subf %100, %107 : vector<8x128xf32>
    %109 = arith.mulf %108, %108 : vector<8x128xf32>
    %cst_64 = arith.constant dense<0.000000e+00> : vector<8xf32>
    %110 = vector.multi_reduction <add>, %109, %cst_64 [1] : vector<8x128xf32> to vector<8xf32>
    %111 = vector.shape_cast %110 : vector<8xf32> to vector<8x1xf32>
    %cst_65 = arith.constant 1.280000e+02 : f32
    %112 = vector.broadcast %cst_65 : f32 to vector<8x1xf32>
    %113 = arith.divf %111, %112 : vector<8x1xf32>
    %114 = vector.broadcast %106 : vector<8x1xf32> to vector<8x128xf32>
    %115 = arith.subf %100, %114 : vector<8x128xf32>
    %cst_66 = arith.constant 9.99999974E-6 : f32
    %116 = vector.broadcast %cst_66 : f32 to vector<8x1xf32>
    %117 = arith.addf %113, %116 : vector<8x1xf32>
    %118 = math.rsqrt %117 : vector<8x1xf32>
    %119 = vector.broadcast %118 : vector<8x1xf32> to vector<8x128xf32>
    %120 = arith.mulf %115, %119 : vector<8x128xf32>
    %121 = vector.broadcast %101 : vector<1x128xf32> to vector<8x128xf32>
    %122 = arith.mulf %120, %121 : vector<8x128xf32>
    %123 = vector.broadcast %102 : vector<1x128xf32> to vector<8x128xf32>
    %124 = arith.addf %122, %123 : vector<8x128xf32>
    %cst_67 = arith.constant 0.000000e+00 : f32
    %125 = vector.broadcast %cst_67 : f32 to vector<8x128xf32>
    %126 = arith.maximumf %124, %125 : vector<8x128xf32>
    %127 = arith.truncf %126 : vector<8x128xf32> to vector<8x128xbf16>
    %c0_68 = arith.constant 0 : index
    %c0_69 = arith.constant 0 : index
    %128 = vector.load %arg10[%c0_68, %c0_69] : memref<128x64xbf16, #tpu.memory_space<vmem>>, vector<128x64xbf16>
    %cst_70 = arith.constant dense<0.000000e+00> : vector<8x64xf32>
    %129 = tpu.matmul %127, %128, %cst_70 {dimension_numbers = #tpu.dot_dimension_numbers<[1], [0], [0], [1], [0, 0, 1, 1], [], []>} : vector<8x128xbf16>, vector<128x64xbf16>, vector<8x64xf32> -> vector<8x64xf32>
    %c0_71 = arith.constant 0 : index
    %c0_72 = arith.constant 0 : index
    %130 = vector.load %arg11[%c0_71, %c0_72] : memref<1x64xf32, #tpu.memory_space<vmem>>, vector<1x64xf32>
    %131 = vector.broadcast %130 : vector<1x64xf32> to vector<8x64xf32>
    %132 = arith.addf %129, %131 : vector<8x64xf32>
    %c0_73 = arith.constant 0 : index
    %c0_74 = arith.constant 0 : index
    %133 = vector.load %arg12[%c0_73, %c0_74] : memref<1x64xf32, #tpu.memory_space<vmem>>, vector<1x64xf32>
    %c0_75 = arith.constant 0 : index
    %c0_76 = arith.constant 0 : index
    %134 = vector.load %arg13[%c0_75, %c0_76] : memref<1x64xf32, #tpu.memory_space<vmem>>, vector<1x64xf32>
    %cst_77 = arith.constant dense<0.000000e+00> : vector<8xf32>
    %135 = vector.multi_reduction <add>, %132, %cst_77 [1] : vector<8x64xf32> to vector<8xf32>
    %136 = vector.shape_cast %135 : vector<8xf32> to vector<8x1xf32>
    %cst_78 = arith.constant 6.400000e+01 : f32
    %137 = vector.broadcast %cst_78 : f32 to vector<8x1xf32>
    %138 = arith.divf %136, %137 : vector<8x1xf32>
    %139 = vector.broadcast %138 : vector<8x1xf32> to vector<8x64xf32>
    %140 = arith.subf %132, %139 : vector<8x64xf32>
    %141 = arith.mulf %140, %140 : vector<8x64xf32>
    %cst_79 = arith.constant dense<0.000000e+00> : vector<8xf32>
    %142 = vector.multi_reduction <add>, %141, %cst_79 [1] : vector<8x64xf32> to vector<8xf32>
    %143 = vector.shape_cast %142 : vector<8xf32> to vector<8x1xf32>
    %cst_80 = arith.constant 6.400000e+01 : f32
    %144 = vector.broadcast %cst_80 : f32 to vector<8x1xf32>
    %145 = arith.divf %143, %144 : vector<8x1xf32>
    %146 = vector.broadcast %138 : vector<8x1xf32> to vector<8x64xf32>
    %147 = arith.subf %132, %146 : vector<8x64xf32>
    %cst_81 = arith.constant 9.99999974E-6 : f32
    %148 = vector.broadcast %cst_81 : f32 to vector<8x1xf32>
    %149 = arith.addf %145, %148 : vector<8x1xf32>
    %150 = math.rsqrt %149 : vector<8x1xf32>
    %151 = vector.broadcast %150 : vector<8x1xf32> to vector<8x64xf32>
    %152 = arith.mulf %147, %151 : vector<8x64xf32>
    %153 = vector.broadcast %133 : vector<1x64xf32> to vector<8x64xf32>
    %154 = arith.mulf %152, %153 : vector<8x64xf32>
    %155 = vector.broadcast %134 : vector<1x64xf32> to vector<8x64xf32>
    %156 = arith.addf %154, %155 : vector<8x64xf32>
    %cst_82 = arith.constant 0.000000e+00 : f32
    %157 = vector.broadcast %cst_82 : f32 to vector<8x64xf32>
    %158 = arith.maximumf %156, %157 : vector<8x64xf32>
    %159 = arith.truncf %158 : vector<8x64xf32> to vector<8x64xbf16>
    %c0_83 = arith.constant 0 : index
    %c0_84 = arith.constant 0 : index
    %160 = vector.load %arg14[%c0_83, %c0_84] : memref<64x128xbf16, #tpu.memory_space<vmem>>, vector<64x128xbf16>
    %cst_85 = arith.constant dense<0.000000e+00> : vector<8x128xf32>
    %161 = tpu.matmul %159, %160, %cst_85 {dimension_numbers = #tpu.dot_dimension_numbers<[1], [0], [0], [1], [0, 0, 1, 1], [], []>} : vector<8x64xbf16>, vector<64x128xbf16>, vector<8x128xf32> -> vector<8x128xf32>
    %c0_86 = arith.constant 0 : index
    %c0_87 = arith.constant 0 : index
    %162 = vector.load %arg15[%c0_86, %c0_87] : memref<1x128xf32, #tpu.memory_space<vmem>>, vector<1x128xf32>
    %163 = vector.broadcast %162 : vector<1x128xf32> to vector<8x128xf32>
    %164 = arith.addf %161, %163 : vector<8x128xf32>
    %c0_88 = arith.constant 0 : index
    %c0_89 = arith.constant 0 : index
    %165 = vector.load %arg16[%c0_88, %c0_89] : memref<8x128xf32, #tpu.memory_space<vmem>>, vector<8x128xf32>
    tpu.vector_store %arg16[%c0_88, %c0_89], %164 {strides = array<i32>} : memref<8x128xf32, #tpu.memory_space<vmem>>, vector<8x128xf32>,
    return
  }
  func.func @transform_0(%arg0: i32) -> (i32, i32) {
    %c0_i32 = arith.constant 0 : i32
    %c0_i32_0 = arith.constant 0 : i32
    return %arg0, %c0_i32 : i32, i32
  }
  func.func @transform_1(%arg0: i32) -> (i32, i32) {
    %c0_i32 = arith.constant 0 : i32
    %c0_i32_0 = arith.constant 0 : i32
    %c0_i32_1 = arith.constant 0 : i32
    return %c0_i32, %c0_i32_0 : i32, i32
  }
  func.func @transform_2(%arg0: i32) -> (i32, i32) {
    %c0_i32 = arith.constant 0 : i32
    %c0_i32_0 = arith.constant 0 : i32
    %c0_i32_1 = arith.constant 0 : i32
    return %c0_i32, %c0_i32_0 : i32, i32
  }
  func.func @transform_3(%arg0: i32) -> (i32, i32) {
    %c0_i32 = arith.constant 0 : i32
    %c0_i32_0 = arith.constant 0 : i32
    %c0_i32_1 = arith.constant 0 : i32
    return %c0_i32, %c0_i32_0 : i32, i32
  }
  func.func @transform_4(%arg0: i32) -> (i32, i32) {
    %c0_i32 = arith.constant 0 : i32
    %c0_i32_0 = arith.constant 0 : i32
    %c0_i32_1 = arith.constant 0 : i32
    return %c0_i32, %c0_i32_0 : i32, i32
  }
  func.func @transform_5(%arg0: i32) -> (i32, i32) {
    %c0_i32 = arith.constant 0 : i32
    %c0_i32_0 = arith.constant 0 : i32
    %c0_i32_1 = arith.constant 0 : i32
    return %c0_i32, %c0_i32_0 : i32, i32
  }
  func.func @transform_6(%arg0: i32) -> (i32, i32) {
    %c0_i32 = arith.constant 0 : i32
    %c0_i32_0 = arith.constant 0 : i32
    %c0_i32_1 = arith.constant 0 : i32
    return %c0_i32, %c0_i32_0 : i32, i32
  }
  func.func @transform_7(%arg0: i32) -> (i32, i32) {
    %c0_i32 = arith.constant 0 : i32
    %c0_i32_0 = arith.constant 0 : i32
    %c0_i32_1 = arith.constant 0 : i32
    return %c0_i32, %c0_i32_0 : i32, i32
  }
  func.func @transform_8(%arg0: i32) -> (i32, i32) {
    %c0_i32 = arith.constant 0 : i32
    %c0_i32_0 = arith.constant 0 : i32
    %c0_i32_1 = arith.constant 0 : i32
    return %c0_i32, %c0_i32_0 : i32, i32
  }
  func.func @transform_9(%arg0: i32) -> (i32, i32) {
    %c0_i32 = arith.constant 0 : i32
    %c0_i32_0 = arith.constant 0 : i32
    %c0_i32_1 = arith.constant 0 : i32
    return %c0_i32, %c0_i32_0 : i32, i32
  }
  func.func @transform_10(%arg0: i32) -> (i32, i32) {
    %c0_i32 = arith.constant 0 : i32
    %c0_i32_0 = arith.constant 0 : i32
    %c0_i32_1 = arith.constant 0 : i32
    return %c0_i32, %c0_i32_0 : i32, i32
  }
  func.func @transform_11(%arg0: i32) -> (i32, i32) {
    %c0_i32 = arith.constant 0 : i32
    %c0_i32_0 = arith.constant 0 : i32
    %c0_i32_1 = arith.constant 0 : i32
    return %c0_i32, %c0_i32_0 : i32, i32
  }
  func.func @transform_12(%arg0: i32) -> (i32, i32) {
    %c0_i32 = arith.constant 0 : i32
    %c0_i32_0 = arith.constant 0 : i32
    %c0_i32_1 = arith.constant 0 : i32
    return %c0_i32, %c0_i32_0 : i32, i32
  }
  func.func @transform_13(%arg0: i32) -> (i32, i32) {
    %c0_i32 = arith.constant 0 : i32
    %c0_i32_0 = arith.constant 0 : i32
    %c0_i32_1 = arith.constant 0 : i32
    return %c0_i32, %c0_i32_0 : i32, i32
  }
  func.func @transform_14(%arg0: i32) -> (i32, i32) {
    %c0_i32 = arith.constant 0 : i32
    %c0_i32_0 = arith.constant 0 : i32
    %c0_i32_1 = arith.constant 0 : i32
    return %c0_i32, %c0_i32_0 : i32, i32
  }
  func.func @transform_15(%arg0: i32) -> (i32, i32) {
    %c0_i32 = arith.constant 0 : i32
    %c0_i32_0 = arith.constant 0 : i32
    return %arg0, %c0_i32 : i32, i32
  }
}

</mosaic_0001>

<llo_original>
// kernel: tpu_custom_call.1
$region0: #{tpu_custom_call.1}
  #allocation0 [shape = 'u32[]', space=smem, size = 0x4, offset = 0x4, fixed_abs, tag = 'smem constant byte address 0x4 - core index']
  #allocation1 [shape = 'u32[144,128]{1,0:T(1,128)}', space=vmem, size = 0x12000, scoped, tag = 'internal scratch']
  %s0 = inlined_call_operand.hbm [shape: f32[8,128], index: 0, kind: input, shape index: {}]
  %s1 = inlined_call_operand.hbm [shape: bf16[128,512], index: 1, kind: input, shape index: {}]
  %s2 = inlined_call_operand.hbm [shape: f32[1,512], index: 2, kind: input, shape index: {}]
  %s3 = inlined_call_operand.vmem [shape: bf16[192,128], index: 3, kind: input, shape index: {}]
  %s4 = inlined_call_operand.vmem [shape: f32[1,128], index: 4, kind: input, shape index: {}]
  %s5 = inlined_call_operand.hbm [shape: bf16[1024,128], index: 5, kind: input, shape index: {}]
  %s6 = inlined_call_operand.vmem [shape: f32[1,128], index: 6, kind: input, shape index: {}]
  %s7 = inlined_call_operand.hbm [shape: f32[1,128], index: 7, kind: input, shape index: {}]
  %s8 = inlined_call_operand.hbm [shape: f32[1,128], index: 8, kind: input, shape index: {}]
  %s9 = inlined_call_operand.vmem [shape: bf16[128,64], index: 9, kind: input, shape index: {}]
  %s10 = inlined_call_operand.vmem [shape: f32[1,64], index: 10, kind: input, shape index: {}]
  %s11 = inlined_call_operand.vmem [shape: f32[1,64], index: 11, kind: input, shape index: {}]
  %s12 = inlined_call_operand.vmem [shape: f32[1,64], index: 12, kind: input, shape index: {}]
  %s13 = inlined_call_operand.hbm [shape: bf16[64,128], index: 13, kind: input, shape index: {}]
  %s14 = inlined_call_operand.vmem [shape: f32[1,128], index: 14, kind: input, shape index: {}]
  %s15 = inlined_call_operand.hbm [shape: f32[8,128], index: 15, kind: output, shape index: {}]
  %s16 = sld [smem:[#allocation0]]
  $region98: #{tpu_custom_call.1} parent=0
    _
  %s18 = ssub.s32 1, %s16
  %s19 = scalar_select 0, %s18, %s16
  $region1: #{tpu_custom_call.1} parent=0
    #allocation2 [shape = 'u8[4096]{0}', space=vmem, size = 0x1000, scoped, tag = 'input window, operand 0, single buffered']
    #allocation3 [shape = 's32[1]{0}', space=sflag, size = 0x4, scoped, tag = 'scoped memory for tpu_custom_call.1']
    #allocation4 [shape = 's32[1]{0}', space=sflag, size = 0x4, scoped, tag = 'scoped memory for tpu_custom_call.1']
    #allocation5 [shape = 'u8[131072]{0}', space=vmem, size = 0x20000, scoped, tag = 'input window, operand 1, single buffered']
    #allocation6 [shape = 's32[1]{0}', space=sflag, size = 0x4, scoped, tag = 'scoped memory for tpu_custom_call.1']
    #allocation7 [shape = 'u8[2048]{0}', space=vmem, size = 0x800, scoped, tag = 'input window, operand 2, single buffered']
    #allocation8 [shape = 'u8[262144]{0}', space=vmem, size = 0x40000, scoped, tag = 'input window, operand 5, single buffered']
    #allocation9 [shape = 's32[1]{0}', space=sflag, size = 0x4, scoped, tag = 'scoped memory for tpu_custom_call.1']
    #allocation10 [shape = 'u8[512]{0}', space=vmem, size = 0x400, scoped, tag = 'input window, operand 7, single buffered']
    #allocation11 [shape = 'u8[512]{0}', space=vmem, size = 0x400, scoped, tag = 'input window, operand 8, single buffered']
    #allocation12 [shape = 's32[1]{0}', space=sflag, size = 0x4, scoped, tag = 'scoped memory for tpu_custom_call.1']
    #allocation13 [shape = 'u8[16384]{0}', space=vmem, size = 0x4000, scoped, tag = 'input window, operand 13, single buffered']
    #allocation14 [shape = 'u8[4096]{0}', space=vmem, size = 0x1000, scoped, tag = 'output window, operand 0, single buffered']
    %20 = vsyncpa [#allocation3], 0
    %21 = vsyncpa [#allocation6], 0
    %22 = vsyncpa [#allocation9], 0
    %23 = vsyncpa [#allocation12], 0
    %24 = vsyncpa [#allocation4], 0
    // Predicated region
    $region2: #{tpu_custom_call.1} parent=1 // pred_check
      _
    $region3: #{tpu_custom_call.1} parent=1 // pred_check_branch
      %26 = sbr.rel (0) target = $region5
    $region4: #{tpu_custom_call.1} parent=1 // pred_region
      %s28 = ssub.s32 128, 128
      %29 = vsyncadd [#allocation3], %s28
      %s31 = sshll.u32 [#allocation2], 4
      %s32 = int_to_ptr.vmem [resolvable:$true] %s31
      %34 = dma.hbm_to_vmem [thread:$0]  %s0, 128, %s32, [#allocation3]
    $region5: #{tpu_custom_call.1} parent=1 // pred_fallthru
      _
    // Predicated region
    $region6: #{tpu_custom_call.1} parent=1 // pred_check
      _
    $region7: #{tpu_custom_call.1} parent=1 // pred_check_branch
      %36 = sbr.rel (0) target = $region9
    $region8: #{tpu_custom_call.1} parent=1 // pred_region
      %s38 = ssub.s32 4096, 4096
      %39 = vsyncadd [#allocation6], %s38
      %s40 = sshll.u32 [#allocation5], 4
      %s41 = int_to_ptr.vmem [resolvable:$true] %s40
      %46 = dma.hbm_to_vmem [thread:$0]  %s1, 4096, %s41, [#allocation6], 256, 256, 16
    $region9: #{tpu_custom_call.1} parent=1 // pred_fallthru
      _
    // Predicated region
    $region10: #{tpu_custom_call.1} parent=1 // pred_check
      _
    $region11: #{tpu_custom_call.1} parent=1 // pred_check_branch
      %48 = sbr.rel (0) target = $region13
    $region12: #{tpu_custom_call.1} parent=1 // pred_region
      %s50 = ssub.s32 64, 64
      %51 = vsyncadd [#allocation6], %s50
      %s53 = sshll.u32 [#allocation7], 4
      %s54 = int_to_ptr.vmem [resolvable:$true] %s53
      %56 = dma.hbm_to_vmem [thread:$0]  %s2, 64, %s54, [#allocation6]
    $region13: #{tpu_custom_call.1} parent=1 // pred_fallthru
      _
    // Predicated region
    $region14: #{tpu_custom_call.1} parent=1 // pred_check
      _
    $region15: #{tpu_custom_call.1} parent=1 // pred_check_branch
      %58 = sbr.rel (0) target = $region17
    $region16: #{tpu_custom_call.1} parent=1 // pred_region
      _
    $region17: #{tpu_custom_call.1} parent=1 // pred_fallthru
      _
    // Predicated region
    $region18: #{tpu_custom_call.1} parent=1 // pred_check
      _
    $region19: #{tpu_custom_call.1} parent=1 // pred_check_branch
      %60 = sbr.rel (0) target = $region21
    $region20: #{tpu_custom_call.1} parent=1 // pred_region
      _
    $region21: #{tpu_custom_call.1} parent=1 // pred_fallthru
      _
    // Predicated region
    $region22: #{tpu_custom_call.1} parent=1 // pred_check
      _
    $region23: #{tpu_custom_call.1} parent=1 // pred_check_branch
      %62 = sbr.rel (0) target = $region25
    $region24: #{tpu_custom_call.1} parent=1 // pred_region
      %s64 = ssub.s32 8192, 8192
      %65 = vsyncadd [#allocation9], %s64
      %s66 = sshll.u32 [#allocation8], 4
      %s67 = int_to_ptr.vmem [resolvable:$true] %s66
      %72 = dma.hbm_to_vmem [thread:$0]  %s5, 8192, %s67, [#allocation9], 64, 64, 4
    $region25: #{tpu_custom_call.1} parent=1 // pred_fallthru
      _
    // Predicated region
    $region26: #{tpu_custom_call.1} parent=1 // pred_check
      _
    $region27: #{tpu_custom_call.1} parent=1 // pred_check_branch
      %74 = sbr.rel (0) target = $region29
    $region28: #{tpu_custom_call.1} parent=1 // pred_region
      _
    $region29: #{tpu_custom_call.1} parent=1 // pred_fallthru
      _
    // Predicated region
    $region30: #{tpu_custom_call.1} parent=1 // pred_check
      _
    $region31: #{tpu_custom_call.1} parent=1 // pred_check_branch
      %76 = sbr.rel (0) target = $region33
    $region32: #{tpu_custom_call.1} parent=1 // pred_region
      %s78 = ssub.s32 16, 16
      %79 = vsyncadd [#allocation9], %s78
      %s81 = sshll.u32 [#allocation10], 4
      %s82 = int_to_ptr.vmem [resolvable:$true] %s81
      %84 = dma.hbm_to_vmem [thread:$0]  %s7, 16, %s82, [#allocation9]
    $region33: #{tpu_custom_call.1} parent=1 // pred_fallthru
      _
    // Predicated region
    $region34: #{tpu_custom_call.1} parent=1 // pred_check
      _
    $region35: #{tpu_custom_call.1} parent=1 // pred_check_branch
      %86 = sbr.rel (0) target = $region37
    $region36: #{tpu_custom_call.1} parent=1 // pred_region
      %s88 = ssub.s32 16, 16
      %89 = vsyncadd [#allocation12], %s88
      %s91 = sshll.u32 [#allocation11], 4
      %s92 = int_to_ptr.vmem [resolvable:$true] %s91
      %94 = dma.hbm_to_vmem [thread:$0]  %s8, 16, %s92, [#allocation12]
    $region37: #{tpu_custom_call.1} parent=1 // pred_fallthru
      _
    // Predicated region
    $region38: #{tpu_custom_call.1} parent=1 // pred_check
      _
    $region39: #{tpu_custom_call.1} parent=1 // pred_check_branch
      %96 = sbr.rel (0) target = $region41
    $region40: #{tpu_custom_call.1} parent=1 // pred_region
      _
    $region41: #{tpu_custom_call.1} parent=1 // pred_fallthru
      _
    // Predicated region
    $region42: #{tpu_custom_call.1} parent=1 // pred_check
      _
    $region43: #{tpu_custom_call.1} parent=1 // pred_check_branch
      %98 = sbr.rel (0) target = $region45
    $region44: #{tpu_custom_call.1} parent=1 // pred_region
      _
    $region45: #{tpu_custom_call.1} parent=1 // pred_fallthru
      _
    // Predicated region
    $region46: #{tpu_custom_call.1} parent=1 // pred_check
      _
    $region47: #{tpu_custom_call.1} parent=1 // pred_check_branch
      %100 = sbr.rel (0) target = $region49
    $region48: #{tpu_custom_call.1} parent=1 // pred_region
      _
    $region49: #{tpu_custom_call.1} parent=1 // pred_fallthru
      _
    // Predicated region
    $region50: #{tpu_custom_call.1} parent=1 // pred_check
      _
    $region51: #{tpu_custom_call.1} parent=1 // pred_check_branch
      %102 = sbr.rel (0) target = $region53
    $region52: #{tpu_custom_call.1} parent=1 // pred_region
      _
    $region53: #{tpu_custom_call.1} parent=1 // pred_fallthru
      _
    // Predicated region
    $region54: #{tpu_custom_call.1} parent=1 // pred_check
      _
    $region55: #{tpu_custom_call.1} parent=1 // pred_check_branch
      %104 = sbr.rel (0) target = $region57
    $region56: #{tpu_custom_call.1} parent=1 // pred_region
      %s106 = ssub.s32 512, 512
      %107 = vsyncadd [#allocation12], %s106
      %s108 = sshll.u32 [#allocation13], 4
      %s109 = int_to_ptr.vmem [resolvable:$true] %s108
      %114 = dma.hbm_to_vmem [thread:$0]  %s13, 512, %s109, [#allocation12], 64, 64, 4
    $region57: #{tpu_custom_call.1} parent=1 // pred_fallthru
      _
    // Predicated region
    $region58: #{tpu_custom_call.1} parent=1 // pred_check
      _
    $region59: #{tpu_custom_call.1} parent=1 // pred_check_branch
      %116 = sbr.rel (0) target = $region61
    $region60: #{tpu_custom_call.1} parent=1 // pred_region
      _
    $region61: #{tpu_custom_call.1} parent=1 // pred_fallthru
      _
    // Predicated region
    $region62: #{tpu_custom_call.1} parent=1 // pred_check
      _
    $region63: #{tpu_custom_call.1} parent=1 // pred_check_branch
      %118 = sbr.rel (0) target = $region65
    $region64: #{tpu_custom_call.1} parent=1 // pred_region
      %119 = dma.done [#allocation3], 128
    $region65: #{tpu_custom_call.1} parent=1 // pred_fallthru
      _
    // Predicated region
    $region66: #{tpu_custom_call.1} parent=1 // pred_check
      _
    $region67: #{tpu_custom_call.1} parent=1 // pred_check_branch
      %121 = sbr.rel (0) target = $region69
    $region68: #{tpu_custom_call.1} parent=1 // pred_region
      %122 = dma.done [#allocation6], 4096
    $region69: #{tpu_custom_call.1} parent=1 // pred_fallthru
      _
    // Predicated region
    $region70: #{tpu_custom_call.1} parent=1 // pred_check
      _
    $region71: #{tpu_custom_call.1} parent=1 // pred_check_branch
      %124 = sbr.rel (0) target = $region73
    $region72: #{tpu_custom_call.1} parent=1 // pred_region
      %125 = dma.done [#allocation6], 64
    $region73: #{tpu_custom_call.1} parent=1 // pred_fallthru
      _
    // Predicated region
    $region74: #{tpu_custom_call.1} parent=1 // pred_check
      _
    $region75: #{tpu_custom_call.1} parent=1 // pred_check_branch
      %127 = sbr.rel (0) target = $region77
    $region76: #{tpu_custom_call.1} parent=1 // pred_region
      %128 = dma.done [#allocation9], 8192
    $region77: #{tpu_custom_call.1} parent=1 // pred_fallthru
      _
    // Predicated region
    $region78: #{tpu_custom_call.1} parent=1 // pred_check
      _
    $region79: #{tpu_custom_call.1} parent=1 // pred_check_branch
      %130 = sbr.rel (0) target = $region81
    $region80: #{tpu_custom_call.1} parent=1 // pred_region
      %131 = dma.done [#allocation9], 16
    $region81: #{tpu_custom_call.1} parent=1 // pred_fallthru
      _
    // Predicated region
    $region82: #{tpu_custom_call.1} parent=1 // pred_check
      _
    $region83: #{tpu_custom_call.1} parent=1 // pred_check_branch
      %133 = sbr.rel (0) target = $region85
    $region84: #{tpu_custom_call.1} parent=1 // pred_region
      %134 = dma.done [#allocation12], 16
    $region85: #{tpu_custom_call.1} parent=1 // pred_fallthru
      _
    // Predicated region
    $region86: #{tpu_custom_call.1} parent=1 // pred_check
      _
    $region87: #{tpu_custom_call.1} parent=1 // pred_check_branch
      %136 = sbr.rel (0) target = $region89
    $region88: #{tpu_custom_call.1} parent=1 // pred_region
      %137 = dma.done [#allocation12], 512
    $region89: #{tpu_custom_call.1} parent=1 // pred_fallthru
      _
    %v139 = vld [vmem:[#allocation2] sm:$0xff]
    %v140 = vpack.c.bf16 %v139, %v139
    %v141 = vld [vmem:[#allocation5] sm:$0xff]
    %v142 = vld [vmem:[#allocation5 + $0x8] sm:$0xff]
    %v143 = vld [vmem:[#allocation5 + $0x10] sm:$0xff]
    %v144 = vld [vmem:[#allocation5 + $0x18] sm:$0xff]
    %v145 = vld [vmem:[#allocation5 + $0x20] sm:$0xff]
    %v146 = vld [vmem:[#allocation5 + $0x28] sm:$0xff]
    %v147 = vld [vmem:[#allocation5 + $0x30] sm:$0xff]
    %v148 = vld [vmem:[#allocation5 + $0x38] sm:$0xff]
    %v149 = vld [vmem:[#allocation5 + $0x40] sm:$0xff]
    %v150 = vld [vmem:[#allocation5 + $0x48] sm:$0xff]
    %v151 = vld [vmem:[#allocation5 + $0x50] sm:$0xff]
    %v152 = vld [vmem:[#allocation5 + $0x58] sm:$0xff]
    %v153 = vld [vmem:[#allocation5 + $0x60] sm:$0xff]
    %v154 = vld [vmem:[#allocation5 + $0x68] sm:$0xff]
    %v155 = vld [vmem:[#allocation5 + $0x70] sm:$0xff]
    %v156 = vld [vmem:[#allocation5 + $0x78] sm:$0xff]
    %v157 = vld [vmem:[#allocation5 + $0x80] sm:$0xff]
    %v158 = vld [vmem:[#allocation5 + $0x88] sm:$0xff]
    %v159 = vld [vmem:[#allocation5 + $0x90] sm:$0xff]
    %v160 = vld [vmem:[#allocation5 + $0x98] sm:$0xff]
    %v161 = vld [vmem:[#allocation5 + $0xa0] sm:$0xff]
    %v162 = vld [vmem:[#allocation5 + $0xa8] sm:$0xff]
    %v163 = vld [vmem:[#allocation5 + $0xb0] sm:$0xff]
    %v164 = vld [vmem:[#allocation5 + $0xb8] sm:$0xff]
    %v165 = vld [vmem:[#allocation5 + $0xc0] sm:$0xff]
    %v166 = vld [vmem:[#allocation5 + $0xc8] sm:$0xff]
    %v167 = vld [vmem:[#allocation5 + $0xd0] sm:$0xff]
    %v168 = vld [vmem:[#allocation5 + $0xd8] sm:$0xff]
    %v169 = vld [vmem:[#allocation5 + $0xe0] sm:$0xff]
    %v170 = vld [vmem:[#allocation5 + $0xe8] sm:$0xff]
    %v171 = vld [vmem:[#allocation5 + $0xf0] sm:$0xff]
    %v172 = vld [vmem:[#allocation5 + $0xf8] sm:$0xff]
    %v173 = vld [vmem:[#allocation7] sm:$0xf]
    %v175 = vlaneseq
    %v176 = vshrl.u32 %v175, 7
    %v177 = vsub.s32 0, %v176
    %v178 = vrot.slane %v173, %v177
    %v179 = vlaneseq
    %v180 = vshrl.u32 %v179, 7
    %v181 = vsub.s32 1, %v180
    %v182 = vrot.slane %v173, %v181
    %v183 = vlaneseq
    %v184 = vshrl.u32 %v183, 7
    %v185 = vsub.s32 2, %v184
    %v186 = vrot.slane %v173, %v185
    %v187 = vlaneseq
    %v188 = vshrl.u32 %v187, 7
    %v189 = vsub.s32 3, %v188
    %v190 = vrot.slane %v173, %v189
    %v227 = vunpack.c.l.b16 %v141
    %v228 = vunpack.c.h.b16 %v141
    %v229 = vunpack.c.l.b16 %v142
    %v230 = vunpack.c.h.b16 %v142
    %v231 = vunpack.c.l.b16 %v143
    %v232 = vunpack.c.h.b16 %v143
    %v233 = vunpack.c.l.b16 %v144
    %v234 = vunpack.c.h.b16 %v144
    %v235 = vunpack.c.l.b16 %v145
    %v236 = vunpack.c.h.b16 %v145
    %v237 = vunpack.c.l.b16 %v146
    %v238 = vunpack.c.h.b16 %v146
    %v239 = vunpack.c.l.b16 %v147
    %v240 = vunpack.c.h.b16 %v147
    %v241 = vunpack.c.l.b16 %v148
    %v242 = vunpack.c.h.b16 %v148
    %v243 = vunpack.c.l.b16 %v149
    %v244 = vunpack.c.h.b16 %v149
    %v245 = vunpack.c.l.b16 %v150
    %v246 = vunpack.c.h.b16 %v150
    %v247 = vunpack.c.l.b16 %v151
    %v248 = vunpack.c.h.b16 %v151
    %v249 = vunpack.c.l.b16 %v152
    %v250 = vunpack.c.h.b16 %v152
    %v251 = vunpack.c.l.b16 %v153
    %v252 = vunpack.c.h.b16 %v153
    %v253 = vunpack.c.l.b16 %v154
    %v254 = vunpack.c.h.b16 %v154
    %v255 = vunpack.c.l.b16 %v155
    %v256 = vunpack.c.h.b16 %v155
    %v257 = vunpack.c.l.b16 %v156
    %v258 = vunpack.c.h.b16 %v156
    %v259 = vunpack.c.l.b16 %v157
    %v260 = vunpack.c.h.b16 %v157
    %v261 = vunpack.c.l.b16 %v158
    %v262 = vunpack.c.h.b16 %v158
    %v263 = vunpack.c.l.b16 %v159
    %v264 = vunpack.c.h.b16 %v159
    %v265 = vunpack.c.l.b16 %v160
    %v266 = vunpack.c.h.b16 %v160
    %v267 = vunpack.c.l.b16 %v161
    %v268 = vunpack.c.h.b16 %v161
    %v269 = vunpack.c.l.b16 %v162
    %v270 = vunpack.c.h.b16 %v162
    %v271 = vunpack.c.l.b16 %v163
    %v272 = vunpack.c.h.b16 %v163
    %v273 = vunpack.c.l.b16 %v164
    %v274 = vunpack.c.h.b16 %v164
    %v275 = vunpack.c.l.b16 %v165
    %v276 = vunpack.c.h.b16 %v165
    %v277 = vunpack.c.l.b16 %v166
    %v278 = vunpack.c.h.b16 %v166
    %v279 = vunpack.c.l.b16 %v167
    %v280 = vunpack.c.h.b16 %v167
    %v281 = vunpack.c.l.b16 %v168
    %v282 = vunpack.c.h.b16 %v168
    %v283 = vunpack.c.l.b16 %v169
    %v284 = vunpack.c.h.b16 %v169
    %v285 = vunpack.c.l.b16 %v170
    %v286 = vunpack.c.h.b16 %v170
    %v287 = vunpack.c.l.b16 %v171
    %v288 = vunpack.c.h.b16 %v171
    %v289 = vunpack.c.l.b16 %v172
    %v290 = vunpack.c.h.b16 %v172
    %v291 = vpack.c.b16 %v231, %v227
    %v292 = vpack.c.b16 %v232, %v228
    %v293 = vpack.c.b16 %v233, %v229
    %v294 = vpack.c.b16 %v234, %v230
    %v295 = vpack.c.b16 %v239, %v235
    %v296 = vpack.c.b16 %v240, %v236
    %v297 = vpack.c.b16 %v241, %v237
    %v298 = vpack.c.b16 %v242, %v238
    %v299 = vpack.c.b16 %v247, %v243
    %v300 = vpack.c.b16 %v248, %v244
    %v301 = vpack.c.b16 %v249, %v245
    %v302 = vpack.c.b16 %v250, %v246
    %v303 = vpack.c.b16 %v255, %v251
    %v304 = vpack.c.b16 %v256, %v252
    %v305 = vpack.c.b16 %v257, %v253
    %v306 = vpack.c.b16 %v258, %v254
    %v307 = vpack.c.b16 %v263, %v259
    %v308 = vpack.c.b16 %v264, %v260
    %v309 = vpack.c.b16 %v265, %v261
    %v310 = vpack.c.b16 %v266, %v262
    %v311 = vpack.c.b16 %v271, %v267
    %v312 = vpack.c.b16 %v272, %v268
    %v313 = vpack.c.b16 %v273, %v269
    %v314 = vpack.c.b16 %v274, %v270
    %v315 = vpack.c.b16 %v279, %v275
    %v316 = vpack.c.b16 %v280, %v276
    %v317 = vpack.c.b16 %v281, %v277
    %v318 = vpack.c.b16 %v282, %v278
    %v319 = vpack.c.b16 %v287, %v283
    %v320 = vpack.c.b16 %v288, %v284
    %v321 = vpack.c.b16 %v289, %v285
    %v322 = vpack.c.b16 %v290, %v286
    %355 = vmatprep.subr.bf16.mxu0 %v292
    %356 = vmatpush1.bf16.msra.mxu0 %v291
    %357 = vmatprep.subr.bf16.mxu0 %v296
    %358 = vmatpush1.bf16.msra.mxu0 %v295
    %359 = vmatprep.subr.bf16.mxu0 %v300
    %360 = vmatpush1.bf16.msra.mxu0 %v299
    %361 = vmatprep.subr.bf16.mxu0 %v304
    %362 = vmatpush1.bf16.msra.mxu0 %v303
    %363 = vmatprep.subr.bf16.mxu0 %v308
    %364 = vmatpush1.bf16.msra.mxu0 %v307
    %365 = vmatprep.subr.bf16.mxu0 %v312
    %366 = vmatpush1.bf16.msra.mxu0 %v311
    %367 = vmatprep.subr.bf16.mxu0 %v316
    %368 = vmatpush1.bf16.msra.mxu0 %v315
    %369 = vmatprep.subr.bf16.mxu0 %v320
    %370 = vmatpush1.bf16.msra.mxu0 %v319
    %371 = vmatprep.subr.bf16.mxu0 0
    %372 = vmatpush1.bf16.msra.mxu0 0
    %373 = vmatprep.subr.bf16.mxu0 0
    %374 = vmatpush1.bf16.msra.mxu0 0
    %375 = vmatprep.subr.bf16.mxu0 0
    %376 = vmatpush1.bf16.msra.mxu0 0
    %377 = vmatprep.subr.bf16.mxu0 0
    %378 = vmatpush1.bf16.msra.mxu0 0
    %379 = vmatprep.subr.bf16.mxu0 0
    %380 = vmatpush1.bf16.msra.mxu0 0
    %381 = vmatprep.subr.bf16.mxu0 0
    %382 = vmatpush1.bf16.msra.mxu0 0
    %383 = vmatprep.subr.bf16.mxu0 0
    %384 = vmatpush1.bf16.msra.mxu0 0
    %385 = vmatprep.subr.bf16.mxu0 0
    %386 = vmatpush1.bf16.msra.mxu0 0
    %387 = vmatprep.mubr.bf16.mxu0 0
    %388 = vmatmul.mubr.bf16.gmra.mrb[0].mxu0 %v140
    %v389 = vpop.f32.mrb[0].mxu0
    %v390 = vadd.f32 %v178, %v389
    %v391 = vpop.f32.mrb[0].mxu0
    %v392 = vadd.f32 %v182, %v391
    %v393 = vpop.f32.mrb[0].mxu0
    %v394 = vpop.f32.mrb[0].mxu0
    %395 = vdwg.mxu0
    %396 = vmatprep.subr.bf16.mxu0 %v294
    %397 = vmatpush1.bf16.msra.mxu0 %v293
    %398 = vmatprep.subr.bf16.mxu0 %v298
    %399 = vmatpush1.bf16.msra.mxu0 %v297
    %400 = vmatprep.subr.bf16.mxu0 %v302
    %401 = vmatpush1.bf16.msra.mxu0 %v301
    %402 = vmatprep.subr.bf16.mxu0 %v306
    %403 = vmatpush1.bf16.msra.mxu0 %v305
    %404 = vmatprep.subr.bf16.mxu0 %v310
    %405 = vmatpush1.bf16.msra.mxu0 %v309
    %406 = vmatprep.subr.bf16.mxu0 %v314
    %407 = vmatpush1.bf16.msra.mxu0 %v313
    %408 = vmatprep.subr.bf16.mxu0 %v318
    %409 = vmatpush1.bf16.msra.mxu0 %v317
    %410 = vmatprep.subr.bf16.mxu0 %v322
    %411 = vmatpush1.bf16.msra.mxu0 %v321
    %412 = vmatprep.subr.bf16.mxu0 0
    %413 = vmatpush1.bf16.msra.mxu0 0
    %414 = vmatprep.subr.bf16.mxu0 0
    %415 = vmatpush1.bf16.msra.mxu0 0
    %416 = vmatprep.subr.bf16.mxu0 0
    %417 = vmatpush1.bf16.msra.mxu0 0
    %418 = vmatprep.subr.bf16.mxu0 0
    %419 = vmatpush1.bf16.msra.mxu0 0
    %420 = vmatprep.subr.bf16.mxu0 0
    %421 = vmatpush1.bf16.msra.mxu0 0
    %422 = vmatprep.subr.bf16.mxu0 0
    %423 = vmatpush1.bf16.msra.mxu0 0
    %424 = vmatprep.subr.bf16.mxu0 0
    %425 = vmatpush1.bf16.msra.mxu0 0
    %426 = vmatprep.subr.bf16.mxu0 0
    %427 = vmatpush1.bf16.msra.mxu0 0
    %428 = vmatprep.mubr.bf16.mxu0 0
    %429 = vmatmul.mubr.bf16.gmra.mrb[0].mxu0 %v140
    %v430 = vpop.f32.mrb[0].mxu0
    %v431 = vadd.f32 %v186, %v430
    %v432 = vpop.f32.mrb[0].mxu0
    %v433 = vadd.f32 %v190, %v432
    %v434 = vpop.f32.mrb[0].mxu0
    %v435 = vpop.f32.mrb[0].mxu0
    %436 = vdwg.mxu0
    %v437 = vmax.f32 %v390, 0.0
    %v438 = vmax.f32 %v392, 0.0
    %v439 = vmax.f32 %v431, 0.0
    %v440 = vmax.f32 %v433, 0.0
    %v441 = vpack.c.bf16 %v437, %v437
    %v442 = vpack.c.bf16 %v438, %v438
    %v443 = vpack.c.bf16 %v439, %v439
    %v444 = vpack.c.bf16 %v440, %v440
    %v445 = vld [vmem:[%s4] sm:$0x1]
    %v446 = vld [vmem:[%s3 + $0x20] sm:$0xf]
    %v447 = vld [vmem:[%s3 + $0x24] sm:$0xf]
    %v448 = vld [vmem:[%s3 + $0x28] sm:$0xf]
    %v449 = vld [vmem:[%s3 + $0x2c] sm:$0xf]
    %v450 = vld [vmem:[%s3 + $0x30] sm:$0xf]
    %v451 = vld [vmem:[%s3 + $0x34] sm:$0xf]
    %v452 = vld [vmem:[%s3 + $0x38] sm:$0xf]
    %v453 = vld [vmem:[%s3 + $0x3c] sm:$0xf]
    %v454 = vld [vmem:[%s3 + $0x40] sm:$0xf]
    %v455 = vld [vmem:[%s3 + $0x44] sm:$0xf]
    %v456 = vld [vmem:[%s3 + $0x48] sm:$0xf]
    %v457 = vld [vmem:[%s3 + $0x4c] sm:$0xf]
    %v458 = vld [vmem:[%s3 + $0x50] sm:$0xf]
    %v459 = vld [vmem:[%s3 + $0x54] sm:$0xf]
    %v460 = vld [vmem:[%s3 + $0x58] sm:$0xf]
    %v461 = vld [vmem:[%s3 + $0x5c] sm:$0xf]
    %v463 = vlaneseq
    %v464 = vshrl.u32 %v463, 7
    %v465 = vsub.s32 0, %v464
    %v466 = vrot.slane %v445, %v465
    %v484 = vunpack.c.l.b16 %v446
    %v485 = vunpack.c.l.b16 %v447
    %v486 = vunpack.c.l.b16 %v448
    %v487 = vunpack.c.l.b16 %v449
    %v488 = vunpack.c.l.b16 %v450
    %v489 = vunpack.c.l.b16 %v451
    %v490 = vunpack.c.l.b16 %v452
    %v491 = vunpack.c.l.b16 %v453
    %v492 = vunpack.c.l.b16 %v454
    %v493 = vunpack.c.l.b16 %v455
    %v494 = vunpack.c.l.b16 %v456
    %v495 = vunpack.c.l.b16 %v457
    %v496 = vunpack.c.l.b16 %v458
    %v497 = vunpack.c.l.b16 %v459
    %v498 = vunpack.c.l.b16 %v460
    %v499 = vunpack.c.l.b16 %v461
    %v500 = vpack.c.b16 %v485, %v484
    %v501 = vpack.c.b16 %v487, %v486
    %v502 = vpack.c.b16 %v489, %v488
    %v503 = vpack.c.b16 %v491, %v490
    %v504 = vpack.c.b16 %v493, %v492
    %v505 = vpack.c.b16 %v495, %v494
    %v506 = vpack.c.b16 %v497, %v496
    %v507 = vpack.c.b16 %v499, %v498
    %516 = vmatprep.subr.bf16.mxu0 0
    %517 = vmatpush1.bf16.msra.mxu0 %v500
    %518 = vmatprep.subr.bf16.mxu0 0
    %519 = vmatpush1.bf16.msra.mxu0 %v501
    %520 = vmatprep.subr.bf16.mxu0 0
    %521 = vmatpush1.bf16.msra.mxu0 %v502
    %522 = vmatprep.subr.bf16.mxu0 0
    %523 = vmatpush1.bf16.msra.mxu0 %v503
    %524 = vmatprep.subr.bf16.mxu0 0
    %525 = vmatpush1.bf16.msra.mxu0 %v504
    %526 = vmatprep.subr.bf16.mxu0 0
    %527 = vmatpush1.bf16.msra.mxu0 %v505
    %528 = vmatprep.subr.bf16.mxu0 0
    %529 = vmatpush1.bf16.msra.mxu0 %v506
    %530 = vmatprep.subr.bf16.mxu0 0
    %531 = vmatpush1.bf16.msra.mxu0 %v507
    %532 = vmatprep.subr.bf16.mxu0 0
    %533 = vmatpush1.bf16.msra.mxu0 0
    %534 = vmatprep.subr.bf16.mxu0 0
    %535 = vmatpush1.bf16.msra.mxu0 0
    %536 = vmatprep.subr.bf16.mxu0 0
    %537 = vmatpush1.bf16.msra.mxu0 0
    %538 = vmatprep.subr.bf16.mxu0 0
    %539 = vmatpush1.bf16.msra.mxu0 0
    %540 = vmatprep.subr.bf16.mxu0 0
    %541 = vmatpush1.bf16.msra.mxu0 0
    %542 = vmatprep.subr.bf16.mxu0 0
    %543 = vmatpush1.bf16.msra.mxu0 0
    %544 = vmatprep.subr.bf16.mxu0 0
    %545 = vmatpush1.bf16.msra.mxu0 0
    %546 = vmatprep.subr.bf16.mxu0 0
    %547 = vmatpush1.bf16.msra.mxu0 0
    %548 = vmatprep.mubr.bf16.mxu0 0
    %549 = vmatmul.mubr.bf16.gmra.mrb[0].mxu0 %v441
    %v550 = vpop.f32.mrb[0].mxu0
    %v551 = vadd.f32 %v466, %v550
    %v552 = vpop.f32.mrb[0].mxu0
    %v553 = vpop.f32.mrb[0].mxu0
    %v554 = vpop.f32.mrb[0].mxu0
    %555 = vdwg.mxu0
    %v556 = vmax.f32 %v551, 0.0
    %v557 = vpack.c.bf16 %v556, %v556
    %v558 = vld [vmem:[#allocation8] sm:$0xf]
    %v559 = vld [vmem:[#allocation8 + $0x4] sm:$0xf]
    %v560 = vld [vmem:[#allocation8 + $0x8] sm:$0xf]
    %v561 = vld [vmem:[#allocation8 + $0xc] sm:$0xf]
    %v562 = vld [vmem:[#allocation8 + $0x10] sm:$0xf]
    %v563 = vld [vmem:[#allocation8 + $0x14] sm:$0xf]
    %v564 = vld [vmem:[#allocation8 + $0x18] sm:$0xf]
    %v565 = vld [vmem:[#allocation8 + $0x1c] sm:$0xf]
    %v566 = vld [vmem:[#allocation8 + $0x20] sm:$0xf]
    %v567 = vld [vmem:[#allocation8 + $0x24] sm:$0xf]
    %v568 = vld [vmem:[#allocation8 + $0x28] sm:$0xf]
    %v569 = vld [vmem:[#allocation8 + $0x2c] sm:$0xf]
    %v570 = vld [vmem:[#allocation8 + $0x30] sm:$0xf]
    %v571 = vld [vmem:[#allocation8 + $0x34] sm:$0xf]
    %v572 = vld [vmem:[#allocation8 + $0x38] sm:$0xf]
    %v573 = vld [vmem:[#allocation8 + $0x3c] sm:$0xf]
    %v574 = vld [vmem:[%s3] sm:$0xf]
    %v575 = vld [vmem:[%s3 + $0x4] sm:$0xf]
    %v576 = vld [vmem:[%s3 + $0x8] sm:$0xf]
    %v577 = vld [vmem:[%s3 + $0xc] sm:$0xf]
    %v578 = vld [vmem:[%s3 + $0x10] sm:$0xf]
    %v579 = vld [vmem:[%s3 + $0x14] sm:$0xf]
    %v580 = vld [vmem:[%s3 + $0x18] sm:$0xf]
    %v581 = vld [vmem:[%s3 + $0x1c] sm:$0xf]
    %v590 = vunpack.c.l.b16 %v574
    %v591 = vunpack.c.l.b16 %v575
    %v592 = vunpack.c.l.b16 %v576
    %v593 = vunpack.c.l.b16 %v577
    %v594 = vunpack.c.l.b16 %v578
    %v595 = vunpack.c.l.b16 %v579
    %v596 = vunpack.c.l.b16 %v580
    %v597 = vunpack.c.l.b16 %v581
    %v598 = vpack.c.b16 %v591, %v590
    %v599 = vpack.c.b16 %v593, %v592
    %v600 = vpack.c.b16 %v595, %v594
    %v601 = vpack.c.b16 %v597, %v596
    %vm606 = vcmask 523264
    %v608 = vsel %vm606, %v442, 0
    %610 = vmatprep.subr.bf16.mxu0 0
    %611 = vmatpush1.bf16.msra.mxu0 %v598
    %612 = vmatprep.subr.bf16.mxu0 0
    %613 = vmatpush1.bf16.msra.mxu0 %v599
    %614 = vmatprep.subr.bf16.mxu0 0
    %615 = vmatpush1.bf16.msra.mxu0 %v600
    %616 = vmatprep.subr.bf16.mxu0 0
    %617 = vmatpush1.bf16.msra.mxu0 %v601
    %618 = vmatprep.subr.bf16.mxu0 0
    %619 = vmatpush1.bf16.msra.mxu0 %v500
    %620 = vmatprep.subr.bf16.mxu0 0
    %621 = vmatpush1.bf16.msra.mxu0 %v501
    %622 = vmatprep.subr.bf16.mxu0 0
    %623 = vmatpush1.bf16.msra.mxu0 %v502
    %624 = vmatprep.subr.bf16.mxu0 0
    %625 = vmatpush1.bf16.msra.mxu0 %v503
    %626 = vmatprep.subr.bf16.mxu0 0
    %627 = vmatpush1.bf16.msra.mxu0 %v504
    %628 = vmatprep.subr.bf16.mxu0 0
    %629 = vmatpush1.bf16.msra.mxu0 %v505
    %630 = vmatprep.subr.bf16.mxu0 0
    %631 = vmatpush1.bf16.msra.mxu0 %v506
    %632 = vmatprep.subr.bf16.mxu0 0
    %633 = vmatpush1.bf16.msra.mxu0 %v507
    %634 = vmatprep.subr.bf16.mxu0 0
    %635 = vmatpush1.bf16.msra.mxu0 0
    %636 = vmatprep.subr.bf16.mxu0 0
    %637 = vmatpush1.bf16.msra.mxu0 0
    %638 = vmatprep.subr.bf16.mxu0 0
    %639 = vmatpush1.bf16.msra.mxu0 0
    %640 = vmatprep.subr.bf16.mxu0 0
    %641 = vmatpush1.bf16.msra.mxu0 0
    %642 = vmatprep.mubr.bf16.mxu0 %v608
    %643 = vmatmul.mubr.bf16.gmra.mrb[0].mxu0 %v441
    %v644 = vpop.f32.mrb[0].mxu0
    %v645 = vadd.f32 %v466, %v644
    %v646 = vpop.f32.mrb[0].mxu0
    %v647 = vpop.f32.mrb[0].mxu0
    %v648 = vpop.f32.mrb[0].mxu0
    %649 = vdwg.mxu0
    %v650 = vmax.f32 %v645, 0.0
    %v651 = vpack.c.bf16 %v650, %v650
    %v652 = vld [vmem:[#allocation8 + $0x40] sm:$0xf]
    %v653 = vld [vmem:[#allocation8 + $0x44] sm:$0xf]
    %v654 = vld [vmem:[#allocation8 + $0x48] sm:$0xf]
    %v655 = vld [vmem:[#allocation8 + $0x4c] sm:$0xf]
    %v656 = vld [vmem:[#allocation8 + $0x50] sm:$0xf]
    %v657 = vld [vmem:[#allocation8 + $0x54] sm:$0xf]
    %v658 = vld [vmem:[#allocation8 + $0x58] sm:$0xf]
    %v659 = vld [vmem:[#allocation8 + $0x5c] sm:$0xf]
    %v660 = vld [vmem:[#allocation8 + $0x60] sm:$0xf]
    %v661 = vld [vmem:[#allocation8 + $0x64] sm:$0xf]
    %v662 = vld [vmem:[#allocation8 + $0x68] sm:$0xf]
    %v663 = vld [vmem:[#allocation8 + $0x6c] sm:$0xf]
    %v664 = vld [vmem:[#allocation8 + $0x70] sm:$0xf]
    %v665 = vld [vmem:[#allocation8 + $0x74] sm:$0xf]
    %v666 = vld [vmem:[#allocation8 + $0x78] sm:$0xf]
    %v667 = vld [vmem:[#allocation8 + $0x7c] sm:$0xf]
    %v684 = vunpack.c.l.b16 %v652
    %v685 = vunpack.c.l.b16 %v653
    %v686 = vunpack.c.l.b16 %v654
    %v687 = vunpack.c.l.b16 %v655
    %v688 = vunpack.c.l.b16 %v656
    %v689 = vunpack.c.l.b16 %v657
    %v690 = vunpack.c.l.b16 %v658
    %v691 = vunpack.c.l.b16 %v659
    %v692 = vunpack.c.l.b16 %v660
    %v693 = vunpack.c.l.b16 %v661
    %v694 = vunpack.c.l.b16 %v662
    %v695 = vunpack.c.l.b16 %v663
    %v696 = vunpack.c.l.b16 %v664
    %v697 = vunpack.c.l.b16 %v665
    %v698 = vunpack.c.l.b16 %v666
    %v699 = vunpack.c.l.b16 %v667
    %v700 = vpack.c.b16 %v685, %v684
    %v701 = vpack.c.b16 %v687, %v686
    %v702 = vpack.c.b16 %v689, %v688
    %v703 = vpack.c.b16 %v691, %v690
    %v704 = vpack.c.b16 %v693, %v692
    %v705 = vpack.c.b16 %v695, %v694
    %v706 = vpack.c.b16 %v697, %v696
    %v707 = vpack.c.b16 %v699, %v698
    %716 = vmatprep.subr.bf16.mxu0 0
    %717 = vmatpush1.bf16.msra.mxu0 %v700
    %718 = vmatprep.subr.bf16.mxu0 0
    %719 = vmatpush1.bf16.msra.mxu0 %v701
    %720 = vmatprep.subr.bf16.mxu0 0
    %721 = vmatpush1.bf16.msra.mxu0 %v702
    %722 = vmatprep.subr.bf16.mxu0 0
    %723 = vmatpush1.bf16.msra.mxu0 %v703
    %724 = vmatprep.subr.bf16.mxu0 0
    %725 = vmatpush1.bf16.msra.mxu0 %v704
    %726 = vmatprep.subr.bf16.mxu0 0
    %727 = vmatpush1.bf16.msra.mxu0 %v705
    %728 = vmatprep.subr.bf16.mxu0 0
    %729 = vmatpush1.bf16.msra.mxu0 %v706
    %730 = vmatprep.subr.bf16.mxu0 0
    %731 = vmatpush1.bf16.msra.mxu0 %v707
    %732 = vmatprep.subr.bf16.mxu0 0
    %733 = vmatpush1.bf16.msra.mxu0 0
    %734 = vmatprep.subr.bf16.mxu0 0
    %735 = vmatpush1.bf16.msra.mxu0 0
    %736 = vmatprep.subr.bf16.mxu0 0
    %737 = vmatpush1.bf16.msra.mxu0 0
    %738 = vmatprep.subr.bf16.mxu0 0
    %739 = vmatpush1.bf16.msra.mxu0 0
    %740 = vmatprep.subr.bf16.mxu0 0
    %741 = vmatpush1.bf16.msra.mxu0 0
    %742 = vmatprep.subr.bf16.mxu0 0
    %743 = vmatpush1.bf16.msra.mxu0 0
    %744 = vmatprep.subr.bf16.mxu0 0
    %745 = vmatpush1.bf16.msra.mxu0 0
    %746 = vmatprep.subr.bf16.mxu0 0
    %747 = vmatpush1.bf16.msra.mxu0 0
    %748 = vmatprep.mubr.bf16.mxu0 0
    %749 = vmatmul.mubr.bf16.gmra.mrb[0].mxu0 %v651
    %v750 = vpop.f32.mrb[0].mxu0
    %v751 = vadd.f32 0.0, %v750
    %v752 = vpop.f32.mrb[0].mxu0
    %v753 = vpop.f32.mrb[0].mxu0
    %v754 = vpop.f32.mrb[0].mxu0
    %755 = vdwg.mxu0
    %v772 = vunpack.c.l.b16 %v558
    %v773 = vunpack.c.l.b16 %v559
    %v774 = vunpack.c.l.b16 %v560
    %v775 = vunpack.c.l.b16 %v561
    %v776 = vunpack.c.l.b16 %v562
    %v777 = vunpack.c.l.b16 %v563
    %v778 = vunpack.c.l.b16 %v564
    %v779 = vunpack.c.l.b16 %v565
    %v780 = vunpack.c.l.b16 %v566
    %v781 = vunpack.c.l.b16 %v567
    %v782 = vunpack.c.l.b16 %v568
    %v783 = vunpack.c.l.b16 %v569
    %v784 = vunpack.c.l.b16 %v570
    %v785 = vunpack.c.l.b16 %v571
    %v786 = vunpack.c.l.b16 %v572
    %v787 = vunpack.c.l.b16 %v573
    %v788 = vpack.c.b16 %v773, %v772
    %v789 = vpack.c.b16 %v775, %v774
    %v790 = vpack.c.b16 %v777, %v776
    %v791 = vpack.c.b16 %v779, %v778
    %v792 = vpack.c.b16 %v781, %v780
    %v793 = vpack.c.b16 %v783, %v782
    %v794 = vpack.c.b16 %v785, %v784
    %v795 = vpack.c.b16 %v787, %v786
    %804 = vmatprep.subr.bf16.mxu0 0
    %805 = vmatpush1.bf16.msra.mxu0 %v788
    %806 = vmatprep.subr.bf16.mxu0 0
    %807 = vmatpush1.bf16.msra.mxu0 %v789
    %808 = vmatprep.subr.bf16.mxu0 0
    %809 = vmatpush1.bf16.msra.mxu0 %v790
    %810 = vmatprep.subr.bf16.mxu0 0
    %811 = vmatpush1.bf16.msra.mxu0 %v791
    %812 = vmatprep.subr.bf16.mxu0 0
    %813 = vmatpush1.bf16.msra.mxu0 %v792
    %814 = vmatprep.subr.bf16.mxu0 0
    %815 = vmatpush1.bf16.msra.mxu0 %v793
    %816 = vmatprep.subr.bf16.mxu0 0
    %817 = vmatpush1.bf16.msra.mxu0 %v794
    %818 = vmatprep.subr.bf16.mxu0 0
    %819 = vmatpush1.bf16.msra.mxu0 %v795
    %820 = vmatprep.subr.bf16.mxu0 0
    %821 = vmatpush1.bf16.msra.mxu0 0
    %822 = vmatprep.subr.bf16.mxu0 0
    %823 = vmatpush1.bf16.msra.mxu0 0
    %824 = vmatprep.subr.bf16.mxu0 0
    %825 = vmatpush1.bf16.msra.mxu0 0
    %826 = vmatprep.subr.bf16.mxu0 0
    %827 = vmatpush1.bf16.msra.mxu0 0
    %828 = vmatprep.subr.bf16.mxu0 0
    %829 = vmatpush1.bf16.msra.mxu0 0
    %830 = vmatprep.subr.bf16.mxu0 0
    %831 = vmatpush1.bf16.msra.mxu0 0
    %832 = vmatprep.subr.bf16.mxu0 0
    %833 = vmatpush1.bf16.msra.mxu0 0
    %834 = vmatprep.subr.bf16.mxu0 0
    %835 = vmatpush1.bf16.msra.mxu0 0
    %836 = vmatprep.mubr.bf16.mxu0 0
    %837 = vmatmul.mubr.bf16.gmra.mrb[0].mxu0 %v557
    %v838 = vpop.f32.mrb[0].mxu0
    %v839 = vadd.f32 %v751, %v838
    %v840 = vpop.f32.mrb[0].mxu0
    %v841 = vpop.f32.mrb[0].mxu0
    %v842 = vpop.f32.mrb[0].mxu0
    %843 = vdwg.mxu0
    %846 = vrot.lane.b32.xlu0 %v441, 64
    %v847 = vpop.permute.xlu0 %846
    %848 = vrot.lane.b32.xlu0 %v442, 64
    %v849 = vpop.permute.xlu0 %848
    %vm850 = vcmask 523264
    %v851 = vsel %vm850, %v847, %v849
    %v854 = vsel %vm606, %v849, 0
    %856 = vmatprep.subr.bf16.mxu0 0
    %857 = vmatpush1.bf16.msra.mxu0 %v598
    %858 = vmatprep.subr.bf16.mxu0 0
    %859 = vmatpush1.bf16.msra.mxu0 %v599
    %860 = vmatprep.subr.bf16.mxu0 0
    %861 = vmatpush1.bf16.msra.mxu0 %v600
    %862 = vmatprep.subr.bf16.mxu0 0
    %863 = vmatpush1.bf16.msra.mxu0 %v601
    %864 = vmatprep.subr.bf16.mxu0 0
    %865 = vmatpush1.bf16.msra.mxu0 %v500
    %866 = vmatprep.subr.bf16.mxu0 0
    %867 = vmatpush1.bf16.msra.mxu0 %v501
    %868 = vmatprep.subr.bf16.mxu0 0
    %869 = vmatpush1.bf16.msra.mxu0 %v502
    %870 = vmatprep.subr.bf16.mxu0 0
    %871 = vmatpush1.bf16.msra.mxu0 %v503
    %872 = vmatprep.subr.bf16.mxu0 0
    %873 = vmatpush1.bf16.msra.mxu0 %v504
    %874 = vmatprep.subr.bf16.mxu0 0
    %875 = vmatpush1.bf16.msra.mxu0 %v505
    %876 = vmatprep.subr.bf16.mxu0 0
    %877 = vmatpush1.bf16.msra.mxu0 %v506
    %878 = vmatprep.subr.bf16.mxu0 0
    %879 = vmatpush1.bf16.msra.mxu0 %v507
    %880 = vmatprep.subr.bf16.mxu0 0
    %881 = vmatpush1.bf16.msra.mxu0 0
    %882 = vmatprep.subr.bf16.mxu0 0
    %883 = vmatpush1.bf16.msra.mxu0 0
    %884 = vmatprep.subr.bf16.mxu0 0
    %885 = vmatpush1.bf16.msra.mxu0 0
    %886 = vmatprep.subr.bf16.mxu0 0
    %887 = vmatpush1.bf16.msra.mxu0 0
    %888 = vmatprep.mubr.bf16.mxu0 %v854
    %889 = vmatmul.mubr.bf16.gmra.mrb[0].mxu0 %v851
    %v890 = vpop.f32.mrb[0].mxu0
    %v891 = vadd.f32 %v466, %v890
    %v892 = vpop.f32.mrb[0].mxu0
    %v893 = vpop.f32.mrb[0].mxu0
    %v894 = vpop.f32.mrb[0].mxu0
    %895 = vdwg.mxu0
    %v896 = vmax.f32 %v891, 0.0
    %v897 = vpack.c.bf16 %v896, %v896
    %v898 = vld [vmem:[#allocation8 + $0x80] sm:$0xf]
    %v899 = vld [vmem:[#allocation8 + $0x84] sm:$0xf]
    %v900 = vld [vmem:[#allocation8 + $0x88] sm:$0xf]
    %v901 = vld [vmem:[#allocation8 + $0x8c] sm:$0xf]
    %v902 = vld [vmem:[#allocation8 + $0x90] sm:$0xf]
    %v903 = vld [vmem:[#allocation8 + $0x94] sm:$0xf]
    %v904 = vld [vmem:[#allocation8 + $0x98] sm:$0xf]
    %v905 = vld [vmem:[#allocation8 + $0x9c] sm:$0xf]
    %v906 = vld [vmem:[#allocation8 + $0xa0] sm:$0xf]
    %v907 = vld [vmem:[#allocation8 + $0xa4] sm:$0xf]
    %v908 = vld [vmem:[#allocation8 + $0xa8] sm:$0xf]
    %v909 = vld [vmem:[#allocation8 + $0xac] sm:$0xf]
    %v910 = vld [vmem:[#allocation8 + $0xb0] sm:$0xf]
    %v911 = vld [vmem:[#allocation8 + $0xb4] sm:$0xf]
    %v912 = vld [vmem:[#allocation8 + $0xb8] sm:$0xf]
    %v913 = vld [vmem:[#allocation8 + $0xbc] sm:$0xf]
    %v930 = vunpack.c.l.b16 %v898
    %v931 = vunpack.c.l.b16 %v899
    %v932 = vunpack.c.l.b16 %v900
    %v933 = vunpack.c.l.b16 %v901
    %v934 = vunpack.c.l.b16 %v902
    %v935 = vunpack.c.l.b16 %v903
    %v936 = vunpack.c.l.b16 %v904
    %v937 = vunpack.c.l.b16 %v905
    %v938 = vunpack.c.l.b16 %v906
    %v939 = vunpack.c.l.b16 %v907
    %v940 = vunpack.c.l.b16 %v908
    %v941 = vunpack.c.l.b16 %v909
    %v942 = vunpack.c.l.b16 %v910
    %v943 = vunpack.c.l.b16 %v911
    %v944 = vunpack.c.l.b16 %v912
    %v945 = vunpack.c.l.b16 %v913
    %v946 = vpack.c.b16 %v931, %v930
    %v947 = vpack.c.b16 %v933, %v932
    %v948 = vpack.c.b16 %v935, %v934
    %v949 = vpack.c.b16 %v937, %v936
    %v950 = vpack.c.b16 %v939, %v938
    %v951 = vpack.c.b16 %v941, %v940
    %v952 = vpack.c.b16 %v943, %v942
    %v953 = vpack.c.b16 %v945, %v944
    %962 = vmatprep.subr.bf16.mxu0 0
    %963 = vmatpush1.bf16.msra.mxu0 %v946
    %964 = vmatprep.subr.bf16.mxu0 0
    %965 = vmatpush1.bf16.msra.mxu0 %v947
    %966 = vmatprep.subr.bf16.mxu0 0
    %967 = vmatpush1.bf16.msra.mxu0 %v948
    %968 = vmatprep.subr.bf16.mxu0 0
    %969 = vmatpush1.bf16.msra.mxu0 %v949
    %970 = vmatprep.subr.bf16.mxu0 0
    %971 = vmatpush1.bf16.msra.mxu0 %v950
    %972 = vmatprep.subr.bf16.mxu0 0
    %973 = vmatpush1.bf16.msra.mxu0 %v951
    %974 = vmatprep.subr.bf16.mxu0 0
    %975 = vmatpush1.bf16.msra.mxu0 %v952
    %976 = vmatprep.subr.bf16.mxu0 0
    %977 = vmatpush1.bf16.msra.mxu0 %v953
    %978 = vmatprep.subr.bf16.mxu0 0
    %979 = vmatpush1.bf16.msra.mxu0 0
    %980 = vmatprep.subr.bf16.mxu0 0
    %981 = vmatpush1.bf16.msra.mxu0 0
    %982 = vmatprep.subr.bf16.mxu0 0
    %983 = vmatpush1.bf16.msra.mxu0 0
    %984 = vmatprep.subr.bf16.mxu0 0
    %985 = vmatpush1.bf16.msra.mxu0 0
    %986 = vmatprep.subr.bf16.mxu0 0
    %987 = vmatpush1.bf16.msra.mxu0 0
    %988 = vmatprep.subr.bf16.mxu0 0
    %989 = vmatpush1.bf16.msra.mxu0 0
    %990 = vmatprep.subr.bf16.mxu0 0
    %991 = vmatpush1.bf16.msra.mxu0 0
    %992 = vmatprep.subr.bf16.mxu0 0
    %993 = vmatpush1.bf16.msra.mxu0 0
    %994 = vmatprep.mubr.bf16.mxu0 0
    %995 = vmatmul.mubr.bf16.gmra.mrb[0].mxu0 %v897
    %v996 = vpop.f32.mrb[0].mxu0
    %v997 = vadd.f32 0.0, %v996
    %v998 = vpop.f32.mrb[0].mxu0
    %v999 = vpop.f32.mrb[0].mxu0
    %v1000 = vpop.f32.mrb[0].mxu0
    %1001 = vdwg.mxu0
    %v1002 = vadd.f32 %v839, %v997
    %v1004 = vsel %vm606, %v443, 0
    %1006 = vmatprep.subr.bf16.mxu0 0
    %1007 = vmatpush1.bf16.msra.mxu0 %v598
    %1008 = vmatprep.subr.bf16.mxu0 0
    %1009 = vmatpush1.bf16.msra.mxu0 %v599
    %1010 = vmatprep.subr.bf16.mxu0 0
    %1011 = vmatpush1.bf16.msra.mxu0 %v600
    %1012 = vmatprep.subr.bf16.mxu0 0
    %1013 = vmatpush1.bf16.msra.mxu0 %v601
    %1014 = vmatprep.subr.bf16.mxu0 0
    %1015 = vmatpush1.bf16.msra.mxu0 %v500
    %1016 = vmatprep.subr.bf16.mxu0 0
    %1017 = vmatpush1.bf16.msra.mxu0 %v501
    %1018 = vmatprep.subr.bf16.mxu0 0
    %1019 = vmatpush1.bf16.msra.mxu0 %v502
    %1020 = vmatprep.subr.bf16.mxu0 0
    %1021 = vmatpush1.bf16.msra.mxu0 %v503
    %1022 = vmatprep.subr.bf16.mxu0 0
    %1023 = vmatpush1.bf16.msra.mxu0 %v504
    %1024 = vmatprep.subr.bf16.mxu0 0
    %1025 = vmatpush1.bf16.msra.mxu0 %v505
    %1026 = vmatprep.subr.bf16.mxu0 0
    %1027 = vmatpush1.bf16.msra.mxu0 %v506
    %1028 = vmatprep.subr.bf16.mxu0 0
    %1029 = vmatpush1.bf16.msra.mxu0 %v507
    %1030 = vmatprep.subr.bf16.mxu0 0
    %1031 = vmatpush1.bf16.msra.mxu0 0
    %1032 = vmatprep.subr.bf16.mxu0 0
    %1033 = vmatpush1.bf16.msra.mxu0 0
    %1034 = vmatprep.subr.bf16.mxu0 0
    %1035 = vmatpush1.bf16.msra.mxu0 0
    %1036 = vmatprep.subr.bf16.mxu0 0
    %1037 = vmatpush1.bf16.msra.mxu0 0
    %1038 = vmatprep.mubr.bf16.mxu0 %v1004
    %1039 = vmatmul.mubr.bf16.gmra.mrb[0].mxu0 %v442
    %v1040 = vpop.f32.mrb[0].mxu0
    %v1041 = vadd.f32 %v466, %v1040
    %v1042 = vpop.f32.mrb[0].mxu0
    %v1043 = vpop.f32.mrb[0].mxu0
    %v1044 = vpop.f32.mrb[0].mxu0
    %1045 = vdwg.mxu0
    %v1046 = vmax.f32 %v1041, 0.0
    %v1047 = vpack.c.bf16 %v1046, %v1046
    %v1048 = vld [vmem:[#allocation8 + $0xc0] sm:$0xf]
    %v1049 = vld [vmem:[#allocation8 + $0xc4] sm:$0xf]
    %v1050 = vld [vmem:[#allocation8 + $0xc8] sm:$0xf]
    %v1051 = vld [vmem:[#allocation8 + $0xcc] sm:$0xf]
    %v1052 = vld [vmem:[#allocation8 + $0xd0] sm:$0xf]
    %v1053 = vld [vmem:[#allocation8 + $0xd4] sm:$0xf]
    %v1054 = vld [vmem:[#allocation8 + $0xd8] sm:$0xf]
    %v1055 = vld [vmem:[#allocation8 + $0xdc] sm:$0xf]
    %v1056 = vld [vmem:[#allocation8 + $0xe0] sm:$0xf]
    %v1057 = vld [vmem:[#allocation8 + $0xe4] sm:$0xf]
    %v1058 = vld [vmem:[#allocation8 + $0xe8] sm:$0xf]
    %v1059 = vld [vmem:[#allocation8 + $0xec] sm:$0xf]
    %v1060 = vld [vmem:[#allocation8 + $0xf0] sm:$0xf]
    %v1061 = vld [vmem:[#allocation8 + $0xf4] sm:$0xf]
    %v1062 = vld [vmem:[#allocation8 + $0xf8] sm:$0xf]
    %v1063 = vld [vmem:[#allocation8 + $0xfc] sm:$0xf]
    %v1080 = vunpack.c.l.b16 %v1048
    %v1081 = vunpack.c.l.b16 %v1049
    %v1082 = vunpack.c.l.b16 %v1050
    %v1083 = vunpack.c.l.b16 %v1051
    %v1084 = vunpack.c.l.b16 %v1052
    %v1085 = vunpack.c.l.b16 %v1053
    %v1086 = vunpack.c.l.b16 %v1054
    %v1087 = vunpack.c.l.b16 %v1055
    %v1088 = vunpack.c.l.b16 %v1056
    %v1089 = vunpack.c.l.b16 %v1057
    %v1090 = vunpack.c.l.b16 %v1058
    %v1091 = vunpack.c.l.b16 %v1059
    %v1092 = vunpack.c.l.b16 %v1060
    %v1093 = vunpack.c.l.b16 %v1061
    %v1094 = vunpack.c.l.b16 %v1062
    %v1095 = vunpack.c.l.b16 %v1063
    %v1096 = vpack.c.b16 %v1081, %v1080
    %v1097 = vpack.c.b16 %v1083, %v1082
    %v1098 = vpack.c.b16 %v1085, %v1084
    %v1099 = vpack.c.b16 %v1087, %v1086
    %v1100 = vpack.c.b16 %v1089, %v1088
    %v1101 = vpack.c.b16 %v1091, %v1090
    %v1102 = vpack.c.b16 %v1093, %v1092
    %v1103 = vpack.c.b16 %v1095, %v1094
    %1112 = vmatprep.subr.bf16.mxu0 0
    %1113 = vmatpush1.bf16.msra.mxu0 %v1096
    %1114 = vmatprep.subr.bf16.mxu0 0
    %1115 = vmatpush1.bf16.msra.mxu0 %v1097
    %1116 = vmatprep.subr.bf16.mxu0 0
    %1117 = vmatpush1.bf16.msra.mxu0 %v1098
    %1118 = vmatprep.subr.bf16.mxu0 0
    %1119 = vmatpush1.bf16.msra.mxu0 %v1099
    %1120 = vmatprep.subr.bf16.mxu0 0
    %1121 = vmatpush1.bf16.msra.mxu0 %v1100
    %1122 = vmatprep.subr.bf16.mxu0 0
    %1123 = vmatpush1.bf16.msra.mxu0 %v1101
    %1124 = vmatprep.subr.bf16.mxu0 0
    %1125 = vmatpush1.bf16.msra.mxu0 %v1102
    %1126 = vmatprep.subr.bf16.mxu0 0
    %1127 = vmatpush1.bf16.msra.mxu0 %v1103
    %1128 = vmatprep.subr.bf16.mxu0 0
    %1129 = vmatpush1.bf16.msra.mxu0 0
    %1130 = vmatprep.subr.bf16.mxu0 0
    %1131 = vmatpush1.bf16.msra.mxu0 0
    %1132 = vmatprep.subr.bf16.mxu0 0
    %1133 = vmatpush1.bf16.msra.mxu0 0
    %1134 = vmatprep.subr.bf16.mxu0 0
    %1135 = vmatpush1.bf16.msra.mxu0 0
    %1136 = vmatprep.subr.bf16.mxu0 0
    %1137 = vmatpush1.bf16.msra.mxu0 0
    %1138 = vmatprep.subr.bf16.mxu0 0
    %1139 = vmatpush1.bf16.msra.mxu0 0
    %1140 = vmatprep.subr.bf16.mxu0 0
    %1141 = vmatpush1.bf16.msra.mxu0 0
    %1142 = vmatprep.subr.bf16.mxu0 0
    %1143 = vmatpush1.bf16.msra.mxu0 0
    %1144 = vmatprep.mubr.bf16.mxu0 0
    %1145 = vmatmul.mubr.bf16.gmra.mrb[0].mxu0 %v1047
    %v1146 = vpop.f32.mrb[0].mxu0
    %v1147 = vadd.f32 0.0, %v1146
    %v1148 = vpop.f32.mrb[0].mxu0
    %v1149 = vpop.f32.mrb[0].mxu0
    %v1150 = vpop.f32.mrb[0].mxu0
    %1151 = vdwg.mxu0
    %v1152 = vadd.f32 %v1002, %v1147
    %1154 = vrot.lane.b32.xlu0 %v443, 64
    %v1155 = vpop.permute.xlu0 %1154
    %v1156 = vsel %vm850, %v849, %v1155
    %v1159 = vsel %vm606, %v1155, 0
    %1161 = vmatprep.subr.bf16.mxu0 0
    %1162 = vmatpush1.bf16.msra.mxu0 %v598
    %1163 = vmatprep.subr.bf16.mxu0 0
    %1164 = vmatpush1.bf16.msra.mxu0 %v599
    %1165 = vmatprep.subr.bf16.mxu0 0
    %1166 = vmatpush1.bf16.msra.mxu0 %v600
    %1167 = vmatprep.subr.bf16.mxu0 0
    %1168 = vmatpush1.bf16.msra.mxu0 %v601
    %1169 = vmatprep.subr.bf16.mxu0 0
    %1170 = vmatpush1.bf16.msra.mxu0 %v500
    %1171 = vmatprep.subr.bf16.mxu0 0
    %1172 = vmatpush1.bf16.msra.mxu0 %v501
    %1173 = vmatprep.subr.bf16.mxu0 0
    %1174 = vmatpush1.bf16.msra.mxu0 %v502
    %1175 = vmatprep.subr.bf16.mxu0 0
    %1176 = vmatpush1.bf16.msra.mxu0 %v503
    %1177 = vmatprep.subr.bf16.mxu0 0
    %1178 = vmatpush1.bf16.msra.mxu0 %v504
    %1179 = vmatprep.subr.bf16.mxu0 0
    %1180 = vmatpush1.bf16.msra.mxu0 %v505
    %1181 = vmatprep.subr.bf16.mxu0 0
    %1182 = vmatpush1.bf16.msra.mxu0 %v506
    %1183 = vmatprep.subr.bf16.mxu0 0
    %1184 = vmatpush1.bf16.msra.mxu0 %v507
    %1185 = vmatprep.subr.bf16.mxu0 0
    %1186 = vmatpush1.bf16.msra.mxu0 0
    %1187 = vmatprep.subr.bf16.mxu0 0
    %1188 = vmatpush1.bf16.msra.mxu0 0
    %1189 = vmatprep.subr.bf16.mxu0 0
    %1190 = vmatpush1.bf16.msra.mxu0 0
    %1191 = vmatprep.subr.bf16.mxu0 0
    %1192 = vmatpush1.bf16.msra.mxu0 0
    %1193 = vmatprep.mubr.bf16.mxu0 %v1159
    %1194 = vmatmul.mubr.bf16.gmra.mrb[0].mxu0 %v1156
    %v1195 = vpop.f32.mrb[0].mxu0
    %v1196 = vadd.f32 %v466, %v1195
    %v1197 = vpop.f32.mrb[0].mxu0
    %v1198 = vpop.f32.mrb[0].mxu0
    %v1199 = vpop.f32.mrb[0].mxu0
    %1200 = vdwg.mxu0
    %v1201 = vmax.f32 %v1196, 0.0
    %v1202 = vpack.c.bf16 %v1201, %v1201
    %v1203 = vld [vmem:[#allocation8 + $0x100] sm:$0xf]
    %v1204 = vld [vmem:[#allocation8 + $0x104] sm:$0xf]
    %v1205 = vld [vmem:[#allocation8 + $0x108] sm:$0xf]
    %v1206 = vld [vmem:[#allocation8 + $0x10c] sm:$0xf]
    %v1207 = vld [vmem:[#allocation8 + $0x110] sm:$0xf]
    %v1208 = vld [vmem:[#allocation8 + $0x114] sm:$0xf]
    %v1209 = vld [vmem:[#allocation8 + $0x118] sm:$0xf]
    %v1210 = vld [vmem:[#allocation8 + $0x11c] sm:$0xf]
    %v1211 = vld [vmem:[#allocation8 + $0x120] sm:$0xf]
    %v1212 = vld [vmem:[#allocation8 + $0x124] sm:$0xf]
    %v1213 = vld [vmem:[#allocation8 + $0x128] sm:$0xf]
    %v1214 = vld [vmem:[#allocation8 + $0x12c] sm:$0xf]
    %v1215 = vld [vmem:[#allocation8 + $0x130] sm:$0xf]
    %v1216 = vld [vmem:[#allocation8 + $0x134] sm:$0xf]
    %v1217 = vld [vmem:[#allocation8 + $0x138] sm:$0xf]
    %v1218 = vld [vmem:[#allocation8 + $0x13c] sm:$0xf]
    %v1235 = vunpack.c.l.b16 %v1203
    %v1236 = vunpack.c.l.b16 %v1204
    %v1237 = vunpack.c.l.b16 %v1205
    %v1238 = vunpack.c.l.b16 %v1206
    %v1239 = vunpack.c.l.b16 %v1207
    %v1240 = vunpack.c.l.b16 %v1208
    %v1241 = vunpack.c.l.b16 %v1209
    %v1242 = vunpack.c.l.b16 %v1210
    %v1243 = vunpack.c.l.b16 %v1211
    %v1244 = vunpack.c.l.b16 %v1212
    %v1245 = vunpack.c.l.b16 %v1213
    %v1246 = vunpack.c.l.b16 %v1214
    %v1247 = vunpack.c.l.b16 %v1215
    %v1248 = vunpack.c.l.b16 %v1216
    %v1249 = vunpack.c.l.b16 %v1217
    %v1250 = vunpack.c.l.b16 %v1218
    %v1251 = vpack.c.b16 %v1236, %v1235
    %v1252 = vpack.c.b16 %v1238, %v1237
    %v1253 = vpack.c.b16 %v1240, %v1239
    %v1254 = vpack.c.b16 %v1242, %v1241
    %v1255 = vpack.c.b16 %v1244, %v1243
    %v1256 = vpack.c.b16 %v1246, %v1245
    %v1257 = vpack.c.b16 %v1248, %v1247
    %v1258 = vpack.c.b16 %v1250, %v1249
    %1267 = vmatprep.subr.bf16.mxu0 0
    %1268 = vmatpush1.bf16.msra.mxu0 %v1251
    %1269 = vmatprep.subr.bf16.mxu0 0
    %1270 = vmatpush1.bf16.msra.mxu0 %v1252
    %1271 = vmatprep.subr.bf16.mxu0 0
    %1272 = vmatpush1.bf16.msra.mxu0 %v1253
    %1273 = vmatprep.subr.bf16.mxu0 0
    %1274 = vmatpush1.bf16.msra.mxu0 %v1254
    %1275 = vmatprep.subr.bf16.mxu0 0
    %1276 = vmatpush1.bf16.msra.mxu0 %v1255
    %1277 = vmatprep.subr.bf16.mxu0 0
    %1278 = vmatpush1.bf16.msra.mxu0 %v1256
    %1279 = vmatprep.subr.bf16.mxu0 0
    %1280 = vmatpush1.bf16.msra.mxu0 %v1257
    %1281 = vmatprep.subr.bf16.mxu0 0
    %1282 = vmatpush1.bf16.msra.mxu0 %v1258
    %1283 = vmatprep.subr.bf16.mxu0 0
    %1284 = vmatpush1.bf16.msra.mxu0 0
    %1285 = vmatprep.subr.bf16.mxu0 0
    %1286 = vmatpush1.bf16.msra.mxu0 0
    %1287 = vmatprep.subr.bf16.mxu0 0
    %1288 = vmatpush1.bf16.msra.mxu0 0
    %1289 = vmatprep.subr.bf16.mxu0 0
    %1290 = vmatpush1.bf16.msra.mxu0 0
    %1291 = vmatprep.subr.bf16.mxu0 0
    %1292 = vmatpush1.bf16.msra.mxu0 0
    %1293 = vmatprep.subr.bf16.mxu0 0
    %1294 = vmatpush1.bf16.msra.mxu0 0
    %1295 = vmatprep.subr.bf16.mxu0 0
    %1296 = vmatpush1.bf16.msra.mxu0 0
    %1297 = vmatprep.subr.bf16.mxu0 0
    %1298 = vmatpush1.bf16.msra.mxu0 0
    %1299 = vmatprep.mubr.bf16.mxu0 0
    %1300 = vmatmul.mubr.bf16.gmra.mrb[0].mxu0 %v1202
    %v1301 = vpop.f32.mrb[0].mxu0
    %v1302 = vadd.f32 0.0, %v1301
    %v1303 = vpop.f32.mrb[0].mxu0
    %v1304 = vpop.f32.mrb[0].mxu0
    %v1305 = vpop.f32.mrb[0].mxu0
    %1306 = vdwg.mxu0
    %v1307 = vadd.f32 %v1152, %v1302
    %v1309 = vsel %vm606, %v444, 0
    %1311 = vmatprep.subr.bf16.mxu0 0
    %1312 = vmatpush1.bf16.msra.mxu0 %v598
    %1313 = vmatprep.subr.bf16.mxu0 0
    %1314 = vmatpush1.bf16.msra.mxu0 %v599
    %1315 = vmatprep.subr.bf16.mxu0 0
    %1316 = vmatpush1.bf16.msra.mxu0 %v600
    %1317 = vmatprep.subr.bf16.mxu0 0
    %1318 = vmatpush1.bf16.msra.mxu0 %v601
    %1319 = vmatprep.subr.bf16.mxu0 0
    %1320 = vmatpush1.bf16.msra.mxu0 %v500
    %1321 = vmatprep.subr.bf16.mxu0 0
    %1322 = vmatpush1.bf16.msra.mxu0 %v501
    %1323 = vmatprep.subr.bf16.mxu0 0
    %1324 = vmatpush1.bf16.msra.mxu0 %v502
    %1325 = vmatprep.subr.bf16.mxu0 0
    %1326 = vmatpush1.bf16.msra.mxu0 %v503
    %1327 = vmatprep.subr.bf16.mxu0 0
    %1328 = vmatpush1.bf16.msra.mxu0 %v504
    %1329 = vmatprep.subr.bf16.mxu0 0
    %1330 = vmatpush1.bf16.msra.mxu0 %v505
    %1331 = vmatprep.subr.bf16.mxu0 0
    %1332 = vmatpush1.bf16.msra.mxu0 %v506
    %1333 = vmatprep.subr.bf16.mxu0 0
    %1334 = vmatpush1.bf16.msra.mxu0 %v507
    %1335 = vmatprep.subr.bf16.mxu0 0
    %1336 = vmatpush1.bf16.msra.mxu0 0
    %1337 = vmatprep.subr.bf16.mxu0 0
    %1338 = vmatpush1.bf16.msra.mxu0 0
    %1339 = vmatprep.subr.bf16.mxu0 0
    %1340 = vmatpush1.bf16.msra.mxu0 0
    %1341 = vmatprep.subr.bf16.mxu0 0
    %1342 = vmatpush1.bf16.msra.mxu0 0
    %1343 = vmatprep.mubr.bf16.mxu0 %v1309
    %1344 = vmatmul.mubr.bf16.gmra.mrb[0].mxu0 %v443
    %v1345 = vpop.f32.mrb[0].mxu0
    %v1346 = vadd.f32 %v466, %v1345
    %v1347 = vpop.f32.mrb[0].mxu0
    %v1348 = vpop.f32.mrb[0].mxu0
    %v1349 = vpop.f32.mrb[0].mxu0
    %1350 = vdwg.mxu0
    %v1351 = vmax.f32 %v1346, 0.0
    %v1352 = vpack.c.bf16 %v1351, %v1351
    %v1353 = vld [vmem:[#allocation8 + $0x140] sm:$0xf]
    %v1354 = vld [vmem:[#allocation8 + $0x144] sm:$0xf]
    %v1355 = vld [vmem:[#allocation8 + $0x148] sm:$0xf]
    %v1356 = vld [vmem:[#allocation8 + $0x14c] sm:$0xf]
    %v1357 = vld [vmem:[#allocation8 + $0x150] sm:$0xf]
    %v1358 = vld [vmem:[#allocation8 + $0x154] sm:$0xf]
    %v1359 = vld [vmem:[#allocation8 + $0x158] sm:$0xf]
    %v1360 = vld [vmem:[#allocation8 + $0x15c] sm:$0xf]
    %v1361 = vld [vmem:[#allocation8 + $0x160] sm:$0xf]
    %v1362 = vld [vmem:[#allocation8 + $0x164] sm:$0xf]
    %v1363 = vld [vmem:[#allocation8 + $0x168] sm:$0xf]
    %v1364 = vld [vmem:[#allocation8 + $0x16c] sm:$0xf]
    %v1365 = vld [vmem:[#allocation8 + $0x170] sm:$0xf]
    %v1366 = vld [vmem:[#allocation8 + $0x174] sm:$0xf]
    %v1367 = vld [vmem:[#allocation8 + $0x178] sm:$0xf]
    %v1368 = vld [vmem:[#allocation8 + $0x17c] sm:$0xf]
    %v1385 = vunpack.c.l.b16 %v1353
    %v1386 = vunpack.c.l.b16 %v1354
    %v1387 = vunpack.c.l.b16 %v1355
    %v1388 = vunpack.c.l.b16 %v1356
    %v1389 = vunpack.c.l.b16 %v1357
    %v1390 = vunpack.c.l.b16 %v1358
    %v1391 = vunpack.c.l.b16 %v1359
    %v1392 = vunpack.c.l.b16 %v1360
    %v1393 = vunpack.c.l.b16 %v1361
    %v1394 = vunpack.c.l.b16 %v1362
    %v1395 = vunpack.c.l.b16 %v1363
    %v1396 = vunpack.c.l.b16 %v1364
    %v1397 = vunpack.c.l.b16 %v1365
    %v1398 = vunpack.c.l.b16 %v1366
    %v1399 = vunpack.c.l.b16 %v1367
    %v1400 = vunpack.c.l.b16 %v1368
    %v1401 = vpack.c.b16 %v1386, %v1385
    %v1402 = vpack.c.b16 %v1388, %v1387
    %v1403 = vpack.c.b16 %v1390, %v1389
    %v1404 = vpack.c.b16 %v1392, %v1391
    %v1405 = vpack.c.b16 %v1394, %v1393
    %v1406 = vpack.c.b16 %v1396, %v1395
    %v1407 = vpack.c.b16 %v1398, %v1397
    %v1408 = vpack.c.b16 %v1400, %v1399
    %1417 = vmatprep.subr.bf16.mxu0 0
    %1418 = vmatpush1.bf16.msra.mxu0 %v1401
    %1419 = vmatprep.subr.bf16.mxu0 0
    %1420 = vmatpush1.bf16.msra.mxu0 %v1402
    %1421 = vmatprep.subr.bf16.mxu0 0
    %1422 = vmatpush1.bf16.msra.mxu0 %v1403
    %1423 = vmatprep.subr.bf16.mxu0 0
    %1424 = vmatpush1.bf16.msra.mxu0 %v1404
    %1425 = vmatprep.subr.bf16.mxu0 0
    %1426 = vmatpush1.bf16.msra.mxu0 %v1405
    %1427 = vmatprep.subr.bf16.mxu0 0
    %1428 = vmatpush1.bf16.msra.mxu0 %v1406
    %1429 = vmatprep.subr.bf16.mxu0 0
    %1430 = vmatpush1.bf16.msra.mxu0 %v1407
    %1431 = vmatprep.subr.bf16.mxu0 0
    %1432 = vmatpush1.bf16.msra.mxu0 %v1408
    %1433 = vmatprep.subr.bf16.mxu0 0
    %1434 = vmatpush1.bf16.msra.mxu0 0
    %1435 = vmatprep.subr.bf16.mxu0 0
    %1436 = vmatpush1.bf16.msra.mxu0 0
    %1437 = vmatprep.subr.bf16.mxu0 0
    %1438 = vmatpush1.bf16.msra.mxu0 0
    %1439 = vmatprep.subr.bf16.mxu0 0
    %1440 = vmatpush1.bf16.msra.mxu0 0
    %1441 = vmatprep.subr.bf16.mxu0 0
    %1442 = vmatpush1.bf16.msra.mxu0 0
    %1443 = vmatprep.subr.bf16.mxu0 0
    %1444 = vmatpush1.bf16.msra.mxu0 0
    %1445 = vmatprep.subr.bf16.mxu0 0
    %1446 = vmatpush1.bf16.msra.mxu0 0
    %1447 = vmatprep.subr.bf16.mxu0 0
    %1448 = vmatpush1.bf16.msra.mxu0 0
    %1449 = vmatprep.mubr.bf16.mxu0 0
    %1450 = vmatmul.mubr.bf16.gmra.mrb[0].mxu0 %v1352
    %v1451 = vpop.f32.mrb[0].mxu0
    %v1452 = vadd.f32 0.0, %v1451
    %v1453 = vpop.f32.mrb[0].mxu0
    %v1454 = vpop.f32.mrb[0].mxu0
    %v1455 = vpop.f32.mrb[0].mxu0
    %1456 = vdwg.mxu0
    %v1457 = vadd.f32 %v1307, %v1452
    %1459 = vrot.lane.b32.xlu0 %v444, 64
    %v1460 = vpop.permute.xlu0 %1459
    %v1461 = vsel %vm850, %v1155, %v1460
    %v1464 = vsel %vm606, %v1460, 0
    %1466 = vmatprep.subr.bf16.mxu0 0
    %1467 = vmatpush1.bf16.msra.mxu0 %v598
    %1468 = vmatprep.subr.bf16.mxu0 0
    %1469 = vmatpush1.bf16.msra.mxu0 %v599
    %1470 = vmatprep.subr.bf16.mxu0 0
    %1471 = vmatpush1.bf16.msra.mxu0 %v600
    %1472 = vmatprep.subr.bf16.mxu0 0
    %1473 = vmatpush1.bf16.msra.mxu0 %v601
    %1474 = vmatprep.subr.bf16.mxu0 0
    %1475 = vmatpush1.bf16.msra.mxu0 %v500
    %1476 = vmatprep.subr.bf16.mxu0 0
    %1477 = vmatpush1.bf16.msra.mxu0 %v501
    %1478 = vmatprep.subr.bf16.mxu0 0
    %1479 = vmatpush1.bf16.msra.mxu0 %v502
    %1480 = vmatprep.subr.bf16.mxu0 0
    %1481 = vmatpush1.bf16.msra.mxu0 %v503
    %1482 = vmatprep.subr.bf16.mxu0 0
    %1483 = vmatpush1.bf16.msra.mxu0 %v504
    %1484 = vmatprep.subr.bf16.mxu0 0
    %1485 = vmatpush1.bf16.msra.mxu0 %v505
    %1486 = vmatprep.subr.bf16.mxu0 0
    %1487 = vmatpush1.bf16.msra.mxu0 %v506
    %1488 = vmatprep.subr.bf16.mxu0 0
    %1489 = vmatpush1.bf16.msra.mxu0 %v507
    %1490 = vmatprep.subr.bf16.mxu0 0
    %1491 = vmatpush1.bf16.msra.mxu0 0
    %1492 = vmatprep.subr.bf16.mxu0 0
    %1493 = vmatpush1.bf16.msra.mxu0 0
    %1494 = vmatprep.subr.bf16.mxu0 0
    %1495 = vmatpush1.bf16.msra.mxu0 0
    %1496 = vmatprep.subr.bf16.mxu0 0
    %1497 = vmatpush1.bf16.msra.mxu0 0
    %1498 = vmatprep.mubr.bf16.mxu0 %v1464
    %1499 = vmatmul.mubr.bf16.gmra.mrb[0].mxu0 %v1461
    %v1500 = vpop.f32.mrb[0].mxu0
    %v1501 = vadd.f32 %v466, %v1500
    %v1502 = vpop.f32.mrb[0].mxu0
    %v1503 = vpop.f32.mrb[0].mxu0
    %v1504 = vpop.f32.mrb[0].mxu0
    %1505 = vdwg.mxu0
    %v1506 = vmax.f32 %v1501, 0.0
    %v1507 = vpack.c.bf16 %v1506, %v1506
    %v1508 = vld [vmem:[#allocation8 + $0x180] sm:$0xf]
    %v1509 = vld [vmem:[#allocation8 + $0x184] sm:$0xf]
    %v1510 = vld [vmem:[#allocation8 + $0x188] sm:$0xf]
    %v1511 = vld [vmem:[#allocation8 + $0x18c] sm:$0xf]
    %v1512 = vld [vmem:[#allocation8 + $0x190] sm:$0xf]
    %v1513 = vld [vmem:[#allocation8 + $0x194] sm:$0xf]
    %v1514 = vld [vmem:[#allocation8 + $0x198] sm:$0xf]
    %v1515 = vld [vmem:[#allocation8 + $0x19c] sm:$0xf]
    %v1516 = vld [vmem:[#allocation8 + $0x1a0] sm:$0xf]
    %v1517 = vld [vmem:[#allocation8 + $0x1a4] sm:$0xf]
    %v1518 = vld [vmem:[#allocation8 + $0x1a8] sm:$0xf]
    %v1519 = vld [vmem:[#allocation8 + $0x1ac] sm:$0xf]
    %v1520 = vld [vmem:[#allocation8 + $0x1b0] sm:$0xf]
    %v1521 = vld [vmem:[#allocation8 + $0x1b4] sm:$0xf]
    %v1522 = vld [vmem:[#allocation8 + $0x1b8] sm:$0xf]
    %v1523 = vld [vmem:[#allocation8 + $0x1bc] sm:$0xf]
    %v1540 = vunpack.c.l.b16 %v1508
    %v1541 = vunpack.c.l.b16 %v1509
    %v1542 = vunpack.c.l.b16 %v1510
    %v1543 = vunpack.c.l.b16 %v1511
    %v1544 = vunpack.c.l.b16 %v1512
    %v1545 = vunpack.c.l.b16 %v1513
    %v1546 = vunpack.c.l.b16 %v1514
    %v1547 = vunpack.c.l.b16 %v1515
    %v1548 = vunpack.c.l.b16 %v1516
    %v1549 = vunpack.c.l.b16 %v1517
    %v1550 = vunpack.c.l.b16 %v1518
    %v1551 = vunpack.c.l.b16 %v1519
    %v1552 = vunpack.c.l.b16 %v1520
    %v1553 = vunpack.c.l.b16 %v1521
    %v1554 = vunpack.c.l.b16 %v1522
    %v1555 = vunpack.c.l.b16 %v1523
    %v1556 = vpack.c.b16 %v1541, %v1540
    %v1557 = vpack.c.b16 %v1543, %v1542
    %v1558 = vpack.c.b16 %v1545, %v1544
    %v1559 = vpack.c.b16 %v1547, %v1546
    %v1560 = vpack.c.b16 %v1549, %v1548
    %v1561 = vpack.c.b16 %v1551, %v1550
    %v1562 = vpack.c.b16 %v1553, %v1552
    %v1563 = vpack.c.b16 %v1555, %v1554
    %1572 = vmatprep.subr.bf16.mxu0 0
    %1573 = vmatpush1.bf16.msra.mxu0 %v1556
    %1574 = vmatprep.subr.bf16.mxu0 0
    %1575 = vmatpush1.bf16.msra.mxu0 %v1557
    %1576 = vmatprep.subr.bf16.mxu0 0
    %1577 = vmatpush1.bf16.msra.mxu0 %v1558
    %1578 = vmatprep.subr.bf16.mxu0 0
    %1579 = vmatpush1.bf16.msra.mxu0 %v1559
    %1580 = vmatprep.subr.bf16.mxu0 0
    %1581 = vmatpush1.bf16.msra.mxu0 %v1560
    %1582 = vmatprep.subr.bf16.mxu0 0
    %1583 = vmatpush1.bf16.msra.mxu0 %v1561
    %1584 = vmatprep.subr.bf16.mxu0 0
    %1585 = vmatpush1.bf16.msra.mxu0 %v1562
    %1586 = vmatprep.subr.bf16.mxu0 0
    %1587 = vmatpush1.bf16.msra.mxu0 %v1563
    %1588 = vmatprep.subr.bf16.mxu0 0
    %1589 = vmatpush1.bf16.msra.mxu0 0
    %1590 = vmatprep.subr.bf16.mxu0 0
    %1591 = vmatpush1.bf16.msra.mxu0 0
    %1592 = vmatprep.subr.bf16.mxu0 0
    %1593 = vmatpush1.bf16.msra.mxu0 0
    %1594 = vmatprep.subr.bf16.mxu0 0
    %1595 = vmatpush1.bf16.msra.mxu0 0
    %1596 = vmatprep.subr.bf16.mxu0 0
    %1597 = vmatpush1.bf16.msra.mxu0 0
    %1598 = vmatprep.subr.bf16.mxu0 0
    %1599 = vmatpush1.bf16.msra.mxu0 0
    %1600 = vmatprep.subr.bf16.mxu0 0
    %1601 = vmatpush1.bf16.msra.mxu0 0
    %1602 = vmatprep.subr.bf16.mxu0 0
    %1603 = vmatpush1.bf16.msra.mxu0 0
    %1604 = vmatprep.mubr.bf16.mxu0 0
    %1605 = vmatmul.mubr.bf16.gmra.mrb[0].mxu0 %v1507
    %v1606 = vpop.f32.mrb[0].mxu0
    %v1607 = vadd.f32 0.0, %v1606
    %v1608 = vpop.f32.mrb[0].mxu0
    %v1609 = vpop.f32.mrb[0].mxu0
    %v1610 = vpop.f32.mrb[0].mxu0
    %1611 = vdwg.mxu0
    %v1612 = vadd.f32 %v1457, %v1607
    %v1613 = vld [vmem:[%s3] sm:$0xf]
    %v1614 = vld [vmem:[%s3 + $0x4] sm:$0xf]
    %v1615 = vld [vmem:[%s3 + $0x8] sm:$0xf]
    %v1616 = vld [vmem:[%s3 + $0xc] sm:$0xf]
    %v1617 = vld [vmem:[%s3 + $0x10] sm:$0xf]
    %v1618 = vld [vmem:[%s3 + $0x14] sm:$0xf]
    %v1619 = vld [vmem:[%s3 + $0x18] sm:$0xf]
    %v1620 = vld [vmem:[%s3 + $0x1c] sm:$0xf]
    %v1621 = vld [vmem:[%s3 + $0x20] sm:$0xf]
    %v1622 = vld [vmem:[%s3 + $0x24] sm:$0xf]
    %v1623 = vld [vmem:[%s3 + $0x28] sm:$0xf]
    %v1624 = vld [vmem:[%s3 + $0x2c] sm:$0xf]
    %v1625 = vld [vmem:[%s3 + $0x30] sm:$0xf]
    %v1626 = vld [vmem:[%s3 + $0x34] sm:$0xf]
    %v1627 = vld [vmem:[%s3 + $0x38] sm:$0xf]
    %v1628 = vld [vmem:[%s3 + $0x3c] sm:$0xf]
    %v1645 = vunpack.c.l.b16 %v1613
    %v1646 = vunpack.c.l.b16 %v1614
    %v1647 = vunpack.c.l.b16 %v1615
    %v1648 = vunpack.c.l.b16 %v1616
    %v1649 = vunpack.c.l.b16 %v1617
    %v1650 = vunpack.c.l.b16 %v1618
    %v1651 = vunpack.c.l.b16 %v1619
    %v1652 = vunpack.c.l.b16 %v1620
    %v1653 = vunpack.c.l.b16 %v1621
    %v1654 = vunpack.c.l.b16 %v1622
    %v1655 = vunpack.c.l.b16 %v1623
    %v1656 = vunpack.c.l.b16 %v1624
    %v1657 = vunpack.c.l.b16 %v1625
    %v1658 = vunpack.c.l.b16 %v1626
    %v1659 = vunpack.c.l.b16 %v1627
    %v1660 = vunpack.c.l.b16 %v1628
    %v1661 = vpack.c.b16 %v1646, %v1645
    %v1662 = vpack.c.b16 %v1648, %v1647
    %v1663 = vpack.c.b16 %v1650, %v1649
    %v1664 = vpack.c.b16 %v1652, %v1651
    %v1665 = vpack.c.b16 %v1654, %v1653
    %v1666 = vpack.c.b16 %v1656, %v1655
    %v1667 = vpack.c.b16 %v1658, %v1657
    %v1668 = vpack.c.b16 %v1660, %v1659
    %1677 = vmatprep.subr.bf16.mxu0 0
    %1678 = vmatpush1.bf16.msra.mxu0 %v1661
    %1679 = vmatprep.subr.bf16.mxu0 0
    %1680 = vmatpush1.bf16.msra.mxu0 %v1662
    %1681 = vmatprep.subr.bf16.mxu0 0
    %1682 = vmatpush1.bf16.msra.mxu0 %v1663
    %1683 = vmatprep.subr.bf16.mxu0 0
    %1684 = vmatpush1.bf16.msra.mxu0 %v1664
    %1685 = vmatprep.subr.bf16.mxu0 0
    %1686 = vmatpush1.bf16.msra.mxu0 %v1665
    %1687 = vmatprep.subr.bf16.mxu0 0
    %1688 = vmatpush1.bf16.msra.mxu0 %v1666
    %1689 = vmatprep.subr.bf16.mxu0 0
    %1690 = vmatpush1.bf16.msra.mxu0 %v1667
    %1691 = vmatprep.subr.bf16.mxu0 0
    %1692 = vmatpush1.bf16.msra.mxu0 %v1668
    %1693 = vmatprep.subr.bf16.mxu0 0
    %1694 = vmatpush1.bf16.msra.mxu0 0
    %1695 = vmatprep.subr.bf16.mxu0 0
    %1696 = vmatpush1.bf16.msra.mxu0 0
    %1697 = vmatprep.subr.bf16.mxu0 0
    %1698 = vmatpush1.bf16.msra.mxu0 0
    %1699 = vmatprep.subr.bf16.mxu0 0
    %1700 = vmatpush1.bf16.msra.mxu0 0
    %1701 = vmatprep.subr.bf16.mxu0 0
    %1702 = vmatpush1.bf16.msra.mxu0 0
    %1703 = vmatprep.subr.bf16.mxu0 0
    %1704 = vmatpush1.bf16.msra.mxu0 0
    %1705 = vmatprep.subr.bf16.mxu0 0
    %1706 = vmatpush1.bf16.msra.mxu0 0
    %1707 = vmatprep.subr.bf16.mxu0 0
    %1708 = vmatpush1.bf16.msra.mxu0 0
    %1709 = vmatprep.mubr.bf16.mxu0 0
    %1710 = vmatmul.mubr.bf16.gmra.mrb[0].mxu0 %v444
    %v1711 = vpop.f32.mrb[0].mxu0
    %v1712 = vadd.f32 %v466, %v1711
    %v1713 = vpop.f32.mrb[0].mxu0
    %v1714 = vpop.f32.mrb[0].mxu0
    %v1715 = vpop.f32.mrb[0].mxu0
    %1716 = vdwg.mxu0
    %v1717 = vmax.f32 %v1712, 0.0
    %v1718 = vpack.c.bf16 %v1717, %v1717
    %v1719 = vld [vmem:[#allocation8 + $0x1c0] sm:$0xf]
    %v1720 = vld [vmem:[#allocation8 + $0x1c4] sm:$0xf]
    %v1721 = vld [vmem:[#allocation8 + $0x1c8] sm:$0xf]
    %v1722 = vld [vmem:[#allocation8 + $0x1cc] sm:$0xf]
    %v1723 = vld [vmem:[#allocation8 + $0x1d0] sm:$0xf]
    %v1724 = vld [vmem:[#allocation8 + $0x1d4] sm:$0xf]
    %v1725 = vld [vmem:[#allocation8 + $0x1d8] sm:$0xf]
    %v1726 = vld [vmem:[#allocation8 + $0x1dc] sm:$0xf]
    %v1727 = vld [vmem:[#allocation8 + $0x1e0] sm:$0xf]
    %v1728 = vld [vmem:[#allocation8 + $0x1e4] sm:$0xf]
    %v1729 = vld [vmem:[#allocation8 + $0x1e8] sm:$0xf]
    %v1730 = vld [vmem:[#allocation8 + $0x1ec] sm:$0xf]
    %v1731 = vld [vmem:[#allocation8 + $0x1f0] sm:$0xf]
    %v1732 = vld [vmem:[#allocation8 + $0x1f4] sm:$0xf]
    %v1733 = vld [vmem:[#allocation8 + $0x1f8] sm:$0xf]
    %v1734 = vld [vmem:[#allocation8 + $0x1fc] sm:$0xf]
    %v1751 = vunpack.c.l.b16 %v1719
    %v1752 = vunpack.c.l.b16 %v1720
    %v1753 = vunpack.c.l.b16 %v1721
    %v1754 = vunpack.c.l.b16 %v1722
    %v1755 = vunpack.c.l.b16 %v1723
    %v1756 = vunpack.c.l.b16 %v1724
    %v1757 = vunpack.c.l.b16 %v1725
    %v1758 = vunpack.c.l.b16 %v1726
    %v1759 = vunpack.c.l.b16 %v1727
    %v1760 = vunpack.c.l.b16 %v1728
    %v1761 = vunpack.c.l.b16 %v1729
    %v1762 = vunpack.c.l.b16 %v1730
    %v1763 = vunpack.c.l.b16 %v1731
    %v1764 = vunpack.c.l.b16 %v1732
    %v1765 = vunpack.c.l.b16 %v1733
    %v1766 = vunpack.c.l.b16 %v1734
    %v1767 = vpack.c.b16 %v1752, %v1751
    %v1768 = vpack.c.b16 %v1754, %v1753
    %v1769 = vpack.c.b16 %v1756, %v1755
    %v1770 = vpack.c.b16 %v1758, %v1757
    %v1771 = vpack.c.b16 %v1760, %v1759
    %v1772 = vpack.c.b16 %v1762, %v1761
    %v1773 = vpack.c.b16 %v1764, %v1763
    %v1774 = vpack.c.b16 %v1766, %v1765
    %1783 = vmatprep.subr.bf16.mxu0 0
    %1784 = vmatpush1.bf16.msra.mxu0 %v1767
    %1785 = vmatprep.subr.bf16.mxu0 0
    %1786 = vmatpush1.bf16.msra.mxu0 %v1768
    %1787 = vmatprep.subr.bf16.mxu0 0
    %1788 = vmatpush1.bf16.msra.mxu0 %v1769
    %1789 = vmatprep.subr.bf16.mxu0 0
    %1790 = vmatpush1.bf16.msra.mxu0 %v1770
    %1791 = vmatprep.subr.bf16.mxu0 0
    %1792 = vmatpush1.bf16.msra.mxu0 %v1771
    %1793 = vmatprep.subr.bf16.mxu0 0
    %1794 = vmatpush1.bf16.msra.mxu0 %v1772
    %1795 = vmatprep.subr.bf16.mxu0 0
    %1796 = vmatpush1.bf16.msra.mxu0 %v1773
    %1797 = vmatprep.subr.bf16.mxu0 0
    %1798 = vmatpush1.bf16.msra.mxu0 %v1774
    %1799 = vmatprep.subr.bf16.mxu0 0
    %1800 = vmatpush1.bf16.msra.mxu0 0
    %1801 = vmatprep.subr.bf16.mxu0 0
    %1802 = vmatpush1.bf16.msra.mxu0 0
    %1803 = vmatprep.subr.bf16.mxu0 0
    %1804 = vmatpush1.bf16.msra.mxu0 0
    %1805 = vmatprep.subr.bf16.mxu0 0
    %1806 = vmatpush1.bf16.msra.mxu0 0
    %1807 = vmatprep.subr.bf16.mxu0 0
    %1808 = vmatpush1.bf16.msra.mxu0 0
    %1809 = vmatprep.subr.bf16.mxu0 0
    %1810 = vmatpush1.bf16.msra.mxu0 0
    %1811 = vmatprep.subr.bf16.mxu0 0
    %1812 = vmatpush1.bf16.msra.mxu0 0
    %1813 = vmatprep.subr.bf16.mxu0 0
    %1814 = vmatpush1.bf16.msra.mxu0 0
    %1815 = vmatprep.mubr.bf16.mxu0 0
    %1816 = vmatmul.mubr.bf16.gmra.mrb[0].mxu0 %v1718
    %v1817 = vpop.f32.mrb[0].mxu0
    %v1818 = vadd.f32 0.0, %v1817
    %v1819 = vpop.f32.mrb[0].mxu0
    %v1820 = vpop.f32.mrb[0].mxu0
    %v1821 = vpop.f32.mrb[0].mxu0
    %1822 = vdwg.mxu0
    %v1823 = vadd.f32 %v1612, %v1818
    %v1824 = vld [vmem:[%s6] sm:$0x1]
    %v1826 = vlaneseq
    %v1827 = vshrl.u32 %v1826, 7
    %v1828 = vsub.s32 0, %v1827
    %v1829 = vrot.slane %v1824, %v1828
    %v1831 = vadd.f32 %v1823, %v1829
    %v1832 = vld [vmem:[#allocation10] sm:$0x1]
    %v1833 = vld [vmem:[#allocation11] sm:$0x1]
    %1834 = vadd.xlane.f32.xlu0 %v1831
    %v1835 = vpop.xlane.xlu0 %1834
    %v1836 = vrcp.pop 128.0
    %v1837 = vmul.f32 %v1835, %v1836
    %v1838 = vsub.f32 %v1831, %v1837
    %v1839 = vmul.f32 %v1838, %v1838
    %1840 = vadd.xlane.f32.xlu0 %v1839
    %v1841 = vpop.xlane.xlu0 %1840
    %v1842 = vmul.f32 %v1841, %v1836
    %v1843 = vadd.f32 %v1842, 1e-05
    %v1844 = vrsqrt.pop %v1843
    %v1845 = vmul.f32 %v1838, %v1844
    %v1847 = vlaneseq
    %v1848 = vshrl.u32 %v1847, 7
    %v1849 = vsub.s32 0, %v1848
    %v1850 = vrot.slane %v1832, %v1849
    %v1852 = vmul.f32 %v1845, %v1850
    %v1854 = vlaneseq
    %v1855 = vshrl.u32 %v1854, 7
    %v1856 = vsub.s32 0, %v1855
    %v1857 = vrot.slane %v1833, %v1856
    %v1859 = vadd.f32 %v1852, %v1857
    %v1860 = vmax.f32 %v1859, 0.0
    %v1861 = vpack.c.bf16 %v1860, %v1860
    %v1862 = vld [vmem:[%s9] sm:$0xf]
    %v1863 = vld [vmem:[%s9 + $0x4] sm:$0xf]
    %v1864 = vld [vmem:[%s9 + $0x8] sm:$0xf]
    %v1865 = vld [vmem:[%s9 + $0xc] sm:$0xf]
    %v1866 = vld [vmem:[%s9 + $0x10] sm:$0xf]
    %v1867 = vld [vmem:[%s9 + $0x14] sm:$0xf]
    %v1868 = vld [vmem:[%s9 + $0x18] sm:$0xf]
    %v1869 = vld [vmem:[%s9 + $0x1c] sm:$0xf]
    %v1870 = vld [vmem:[%s9 + $0x20] sm:$0xf]
    %v1871 = vld [vmem:[%s9 + $0x24] sm:$0xf]
    %v1872 = vld [vmem:[%s9 + $0x28] sm:$0xf]
    %v1873 = vld [vmem:[%s9 + $0x2c] sm:$0xf]
    %v1874 = vld [vmem:[%s9 + $0x30] sm:$0xf]
    %v1875 = vld [vmem:[%s9 + $0x34] sm:$0xf]
    %v1876 = vld [vmem:[%s9 + $0x38] sm:$0xf]
    %v1877 = vld [vmem:[%s9 + $0x3c] sm:$0xf]
    %v1878 = vld [vmem:[%s10] sm:$0x1]
    %v1880 = vlaneseq
    %v1881 = vshrl.u32 %v1880, 7
    %v1882 = vsub.s32 0, %v1881
    %v1883 = vrot.slane %v1878, %v1882
    %v1901 = vunpack.c.l.b16 %v1862
    %v1902 = vunpack.c.l.b16 %v1863
    %v1903 = vunpack.c.l.b16 %v1864
    %v1904 = vunpack.c.l.b16 %v1865
    %v1905 = vunpack.c.l.b16 %v1866
    %v1906 = vunpack.c.l.b16 %v1867
    %v1907 = vunpack.c.l.b16 %v1868
    %v1908 = vunpack.c.l.b16 %v1869
    %v1909 = vunpack.c.l.b16 %v1870
    %v1910 = vunpack.c.l.b16 %v1871
    %v1911 = vunpack.c.l.b16 %v1872
    %v1912 = vunpack.c.l.b16 %v1873
    %v1913 = vunpack.c.l.b16 %v1874
    %v1914 = vunpack.c.l.b16 %v1875
    %v1915 = vunpack.c.l.b16 %v1876
    %v1916 = vunpack.c.l.b16 %v1877
    %v1917 = vpack.c.b16 %v1902, %v1901
    %v1918 = vpack.c.b16 %v1904, %v1903
    %v1919 = vpack.c.b16 %v1906, %v1905
    %v1920 = vpack.c.b16 %v1908, %v1907
    %v1921 = vpack.c.b16 %v1910, %v1909
    %v1922 = vpack.c.b16 %v1912, %v1911
    %v1923 = vpack.c.b16 %v1914, %v1913
    %v1924 = vpack.c.b16 %v1916, %v1915
    %1933 = vmatprep.subr.bf16.mxu0 0
    %1934 = vmatpush1.bf16.msra.mxu0 %v1917
    %1935 = vmatprep.subr.bf16.mxu0 0
    %1936 = vmatpush1.bf16.msra.mxu0 %v1918
    %1937 = vmatprep.subr.bf16.mxu0 0
    %1938 = vmatpush1.bf16.msra.mxu0 %v1919
    %1939 = vmatprep.subr.bf16.mxu0 0
    %1940 = vmatpush1.bf16.msra.mxu0 %v1920
    %1941 = vmatprep.subr.bf16.mxu0 0
    %1942 = vmatpush1.bf16.msra.mxu0 %v1921
    %1943 = vmatprep.subr.bf16.mxu0 0
    %1944 = vmatpush1.bf16.msra.mxu0 %v1922
    %1945 = vmatprep.subr.bf16.mxu0 0
    %1946 = vmatpush1.bf16.msra.mxu0 %v1923
    %1947 = vmatprep.subr.bf16.mxu0 0
    %1948 = vmatpush1.bf16.msra.mxu0 %v1924
    %1949 = vmatprep.subr.bf16.mxu0 0
    %1950 = vmatpush1.bf16.msra.mxu0 0
    %1951 = vmatprep.subr.bf16.mxu0 0
    %1952 = vmatpush1.bf16.msra.mxu0 0
    %1953 = vmatprep.subr.bf16.mxu0 0
    %1954 = vmatpush1.bf16.msra.mxu0 0
    %1955 = vmatprep.subr.bf16.mxu0 0
    %1956 = vmatpush1.bf16.msra.mxu0 0
    %1957 = vmatprep.subr.bf16.mxu0 0
    %1958 = vmatpush1.bf16.msra.mxu0 0
    %1959 = vmatprep.subr.bf16.mxu0 0
    %1960 = vmatpush1.bf16.msra.mxu0 0
    %1961 = vmatprep.subr.bf16.mxu0 0
    %1962 = vmatpush1.bf16.msra.mxu0 0
    %1963 = vmatprep.subr.bf16.mxu0 0
    %1964 = vmatpush1.bf16.msra.mxu0 0
    %1965 = vmatprep.mubr.bf16.mxu0 0
    %1966 = vmatmul.mubr.bf16.gmra.mrb[0].mxu0 %v1861
    %v1967 = vpop.f32.mrb[0].mxu0
    %v1968 = vadd.f32 %v1883, %v1967
    %v1969 = vpop.f32.mrb[0].mxu0
    %v1970 = vpop.f32.mrb[0].mxu0
    %v1971 = vpop.f32.mrb[0].mxu0
    %1972 = vdwg.mxu0
    %v1973 = vld [vmem:[%s11] sm:$0x1]
    %v1974 = vld [vmem:[%s12] sm:$0x1]
    %v1975 = vsel %vm606, %v1968, 0.0
    %1976 = vadd.xlane.f32.xlu0 %v1975
    %v1977 = vpop.xlane.xlu0 %1976
    %v1978 = vrcp.pop 64.0
    %v1979 = vmul.f32 %v1977, %v1978
    %v1980 = vsub.f32 %v1968, %v1979
    %v1981 = vmul.f32 %v1980, %v1980
    %v1982 = vsel %vm606, %v1981, 0.0
    %1983 = vadd.xlane.f32.xlu0 %v1982
    %v1984 = vpop.xlane.xlu0 %1983
    %v1985 = vmul.f32 %v1984, %v1978
    %v1986 = vadd.f32 %v1985, 1e-05
    %v1987 = vrsqrt.pop %v1986
    %v1988 = vmul.f32 %v1980, %v1987
    %v1990 = vlaneseq
    %v1991 = vshrl.u32 %v1990, 7
    %v1992 = vsub.s32 0, %v1991
    %v1993 = vrot.slane %v1973, %v1992
    %v1995 = vmul.f32 %v1988, %v1993
    %v1997 = vlaneseq
    %v1998 = vshrl.u32 %v1997, 7
    %v1999 = vsub.s32 0, %v1998
    %v2000 = vrot.slane %v1974, %v1999
    %v2002 = vadd.f32 %v1995, %v2000
    %v2003 = vmax.f32 %v2002, 0.0
    %v2004 = vpack.c.bf16 %v2003, %v2003
    %v2005 = vld [vmem:[#allocation13] sm:$0xf]
    %v2006 = vld [vmem:[#allocation13 + $0x4] sm:$0xf]
    %v2007 = vld [vmem:[#allocation13 + $0x8] sm:$0xf]
    %v2008 = vld [vmem:[#allocation13 + $0xc] sm:$0xf]
    %v2009 = vld [vmem:[#allocation13 + $0x10] sm:$0xf]
    %v2010 = vld [vmem:[#allocation13 + $0x14] sm:$0xf]
    %v2011 = vld [vmem:[#allocation13 + $0x18] sm:$0xf]
    %v2012 = vld [vmem:[#allocation13 + $0x1c] sm:$0xf]
    %v2013 = vld [vmem:[%s14] sm:$0x1]
    %v2015 = vlaneseq
    %v2016 = vshrl.u32 %v2015, 7
    %v2017 = vsub.s32 0, %v2016
    %v2018 = vrot.slane %v2013, %v2017
    %v2028 = vunpack.c.l.b16 %v2005
    %v2029 = vunpack.c.l.b16 %v2006
    %v2030 = vunpack.c.l.b16 %v2007
    %v2031 = vunpack.c.l.b16 %v2008
    %v2032 = vunpack.c.l.b16 %v2009
    %v2033 = vunpack.c.l.b16 %v2010
    %v2034 = vunpack.c.l.b16 %v2011
    %v2035 = vunpack.c.l.b16 %v2012
    %v2036 = vpack.c.b16 %v2029, %v2028
    %v2037 = vpack.c.b16 %v2031, %v2030
    %v2038 = vpack.c.b16 %v2033, %v2032
    %v2039 = vpack.c.b16 %v2035, %v2034
    %v2045 = vsel %vm606, %v2004, 0
    %2047 = vmatprep.subr.bf16.mxu0 0
    %2048 = vmatpush1.bf16.msra.mxu0 %v2036
    %2049 = vmatprep.subr.bf16.mxu0 0
    %2050 = vmatpush1.bf16.msra.mxu0 %v2037
    %2051 = vmatprep.subr.bf16.mxu0 0
    %2052 = vmatpush1.bf16.msra.mxu0 %v2038
    %2053 = vmatprep.subr.bf16.mxu0 0
    %2054 = vmatpush1.bf16.msra.mxu0 %v2039
    %2055 = vmatprep.subr.bf16.mxu0 0
    %2056 = vmatpush1.bf16.msra.mxu0 0
    %2057 = vmatprep.subr.bf16.mxu0 0
    %2058 = vmatpush1.bf16.msra.mxu0 0
    %2059 = vmatprep.subr.bf16.mxu0 0
    %2060 = vmatpush1.bf16.msra.mxu0 0
    %2061 = vmatprep.subr.bf16.mxu0 0
    %2062 = vmatpush1.bf16.msra.mxu0 0
    %2063 = vmatprep.subr.bf16.mxu0 0
    %2064 = vmatpush1.bf16.msra.mxu0 0
    %2065 = vmatprep.subr.bf16.mxu0 0
    %2066 = vmatpush1.bf16.msra.mxu0 0
    %2067 = vmatprep.subr.bf16.mxu0 0
    %2068 = vmatpush1.bf16.msra.mxu0 0
    %2069 = vmatprep.subr.bf16.mxu0 0
    %2070 = vmatpush1.bf16.msra.mxu0 0
    %2071 = vmatprep.subr.bf16.mxu0 0
    %2072 = vmatpush1.bf16.msra.mxu0 0
    %2073 = vmatprep.subr.bf16.mxu0 0
    %2074 = vmatpush1.bf16.msra.mxu0 0
    %2075 = vmatprep.subr.bf16.mxu0 0
    %2076 = vmatpush1.bf16.msra.mxu0 0
    %2077 = vmatprep.subr.bf16.mxu0 0
    %2078 = vmatpush1.bf16.msra.mxu0 0
    %2079 = vmatprep.mubr.bf16.mxu0 0
    %2080 = vmatmul.mubr.bf16.gmra.mrb[0].mxu0 %v2045
    %v2081 = vpop.f32.mrb[0].mxu0
    %v2082 = vadd.f32 %v2018, %v2081
    %v2083 = vpop.f32.mrb[0].mxu0
    %v2084 = vpop.f32.mrb[0].mxu0
    %v2085 = vpop.f32.mrb[0].mxu0
    %2086 = vdwg.mxu0
    %2087 = vst [vmem:[#allocation14] sm:$0xff] %v2082
    // Predicated region
    $region90: #{tpu_custom_call.1} parent=1 // pred_check
      _
    $region91: #{tpu_custom_call.1} parent=1 // pred_check_branch
      %2089 = sbr.rel (0) target = $region93
    $region92: #{tpu_custom_call.1} parent=1 // pred_region
      %s2091 = ssub.s32 128, 128
      %2092 = vsyncadd [#allocation4], %s2091
      %s2094 = sshll.u32 [#allocation14], 4
      %s2095 = int_to_ptr.vmem [resolvable:$true] %s2094
      %2097 = dma.vmem_to_hbm [thread:$0]  %s2095, 128, %s15, [#allocation4]
    $region93: #{tpu_custom_call.1} parent=1 // pred_fallthru
      _
    // Predicated region
    $region94: #{tpu_custom_call.1} parent=1 // pred_check
      _
    $region95: #{tpu_custom_call.1} parent=1 // pred_check_branch
      %2099 = sbr.rel (0) target = $region97
    $region96: #{tpu_custom_call.1} parent=1 // pred_region
      %2100 = dma.done [#allocation4], 128
    $region97: #{tpu_custom_call.1} parent=1 // pred_fallthru
      _
    %2101 = vsyncpa [#allocation3], 1
    %2102 = vsyncpa [#allocation6], 1
    %2103 = vsyncpa [#allocation9], 1
    %2104 = vsyncpa [#allocation12], 1
    %2105 = vsyncpa [#allocation4], 1

</llo_original>
